<compile_context>
chip_gen: v6e
topology: v6e:2x2x1
jax: 0.10.0
libtpu: 0.0.40
codegen_flags: <defaults>
</compile_context>

<pallas_src>
import numpy as np
import jax
import jax.numpy as jnp
from jax import lax
from jax.experimental import pallas as pl
from jax.experimental.pallas import tpu as pltpu

_BN_EPS = 1e-5
_LANE = 128


# --------------------------------------------------------------------------------------
# Tiling / budgeting helpers
# --------------------------------------------------------------------------------------
def _round_up(x, m):
    return ((x + m - 1) // m) * m


def _pick_div_tile(dim, target, align):
    """Largest divisor of `dim` that is a multiple of `align` and <= `target`.
    Falls back to the full dimension (always a legal block size)."""
    if dim <= target:
        return dim
    t = (target // align) * align
    while t >= align:
        if dim % t == 0:
            return t
        t -= align
    return dim


def _vmem_capacity_bytes():
    try:
        return int(pltpu.get_tpu_info().vmem_capacity_bytes)
    except Exception:
        return 64 << 20            # conservative: v7x per-TensorCore VMEM


_VMEM_CAP = _vmem_capacity_bytes()
_BIG_VMEM = _VMEM_CAP >= (100 << 20)        # v5e / v6e (128 MiB) vs v7x (64 MiB)

# First-layer (no-BN) GEMM tile targets: bigger on 128 MiB parts, 512 on v7x.
_BM_RELU = 1024 if _BIG_VMEM else 512
_BK_RELU = 1024 if _BIG_VMEM else 512
_BN_RELU = 256
# BN-GEMM tile targets: M-tiling makes the old full-M accumulator cap moot; keep the
# fp32 accumulator (bm*bn*4 = 0.5 MiB) and K tile modest on every generation.
_BM_BN = 512
_BK_BN = 512
_BN_BN = 256


def _vmem_limit(footprint_bytes):
    """Scoped-VMEM request with headroom; never below the stock default, never above
    v7x physical per-core VMEM."""
    return int(min(max(4 * footprint_bytes, 32 << 20), 64 << 20))


def _gemm_footprint(bm, bk, bn, extra_out_bytes=0):
    # double-buffered bf16 input tiles + double-buffered bf16 output tile + fp32 acc
    fp = 2 * (bm * bk * 2) + 2 * (bk * bn * 2) + 2 * (bm * bn * 2) + bm * bn * 4
    return fp + extra_out_bytes


# --------------------------------------------------------------------------------------
# Pallas kernels
# --------------------------------------------------------------------------------------
def _gemm_relu_kernel(x_ref, w_ref, o_ref, acc_ref):
    # Conv-as-GEMM with a K-tiled fp32 accumulator; fused ReLU epilogue.
    k = pl.program_id(2)

    @pl.when(k == 0)
    def _():
        acc_ref[...] = jnp.zeros_like(acc_ref)

    acc_ref[...] += jnp.dot(x_ref[...], w_ref[...],
                            preferred_element_type=jnp.float32)

    @pl.when(k == pl.num_programs(2) - 1)
    def _():
        o_ref[...] = jnp.maximum(acc_ref[...], 0.0).astype(o_ref.dtype)


def conv_gemm_relu(x, w):
    """x: (M, K) bf16 im2col patches, w: (K, Cout_pad) bf16 -> (M, Cout_pad) bf16."""
    M, K = x.shape
    coutp = w.shape[1]
    bm = _pick_div_tile(M, _BM_RELU, 8)
    bk = _pick_div_tile(K, _BK_RELU, 128)
    bn = _pick_div_tile(coutp, _BN_RELU, 128)
    grid = (M // bm, coutp // bn, K // bk)
    return pl.pallas_call(
        _gemm_relu_kernel,
        out_shape=jax.ShapeDtypeStruct((M, coutp), jnp.bfloat16),
        grid=grid,
        in_specs=[
            pl.BlockSpec((bm, bk), lambda i, j, k: (i, k)),
            pl.BlockSpec((bk, bn), lambda i, j, k: (k, j)),
        ],
        out_specs=pl.BlockSpec((bm, bn), lambda i, j, k: (i, j)),
        scratch_shapes=[pltpu.VMEM((bm, bn), jnp.float32)],
        compiler_params=pltpu.CompilerParams(
            dimension_semantics=("parallel", "parallel", "arbitrary"),
            vmem_limit_bytes=_vmem_limit(_gemm_footprint(bm, bk, bn))),
    )(x, w)


def _gemm_stats_kernel(x_ref, w_ref, y_ref, stats_ref, acc_ref):
    # Pass 1 of the BN layers: M/Cout/K-tiled GEMM.  At the last K step, write the bf16
    # output tile and this tile's per-channel [sum, sum-of-squares] partial (rows 0/1 of
    # an (8, bn) block so the store stays (8,128)-aligned).  var is later formed as
    # E[y^2] - mean^2, so only one pass over the accumulator is needed here.
    k = pl.program_id(2)

    @pl.when(k == 0)
    def _():
        acc_ref[...] = jnp.zeros_like(acc_ref)

    acc_ref[...] += jnp.dot(x_ref[...], w_ref[...],
                            preferred_element_type=jnp.float32)

    @pl.when(k == pl.num_programs(2) - 1)
    def _():
        y = acc_ref[...]
        y_ref[...] = y.astype(y_ref.dtype)
        s = jnp.sum(y, axis=0, keepdims=True)            # (1, bn)
        ss = jnp.sum(y * y, axis=0, keepdims=True)       # (1, bn)
        row = lax.broadcasted_iota(jnp.int32, stats_ref.shape, 0)
        stats_ref[...] = jnp.where(row == 0, s, jnp.where(row == 1, ss, 0.0))


def conv_gemm_stats(x, w):
    """x: (M, K) bf16, w: (K, Cout_pad) bf16.
    Returns y (M, Cout_pad) bf16 and per-M-tile stats (n_m_tiles*8, Cout_pad) f32 where
    rows i*8+0 / i*8+1 hold tile i's per-channel sum / sum-of-squares."""
    M, K = x.shape
    coutp = w.shape[1]
    bm = _pick_div_tile(M, _BM_BN, 8)
    bk = _pick_div_tile(K, _BK_BN, 128)
    bn = _pick_div_tile(coutp, _BN_BN, 128)
    n_m = M // bm
    grid = (n_m, coutp // bn, K // bk)
    footprint = _gemm_footprint(bm, bk, bn, extra_out_bytes=2 * 8 * bn * 4)
    return pl.pallas_call(
        _gemm_stats_kernel,
        out_shape=(jax.ShapeDtypeStruct((M, coutp), jnp.bfloat16),
                   jax.ShapeDtypeStruct((n_m * 8, coutp), jnp.float32)),
        grid=grid,
        in_specs=[
            pl.BlockSpec((bm, bk), lambda i, j, k: (i, k)),
            pl.BlockSpec((bk, bn), lambda i, j, k: (k, j)),
        ],
        out_specs=(pl.BlockSpec((bm, bn), lambda i, j, k: (i, j)),
                   pl.BlockSpec((8, bn), lambda i, j, k: (i, j))),
        scratch_shapes=[pltpu.VMEM((bm, bn), jnp.float32)],
        compiler_params=pltpu.CompilerParams(
            dimension_semantics=("parallel", "parallel", "arbitrary"),
            vmem_limit_bytes=_vmem_limit(footprint)),
    )(x, w)


def _bn_relu_kernel(y_ref, scale_ref, shift_ref, o_ref):
    # Pass 2 of the BN layers: y*scale + shift (per output channel) + ReLU, bf16 store.
    y = y_ref[...].astype(jnp.float32)
    o_ref[...] = jnp.maximum(y * scale_ref[...] + shift_ref[...], 0.0).astype(o_ref.dtype)


def bn_relu_apply(y, scale, shift):
    """y: (M, Cout_pad) bf16, scale/shift: (1, Cout_pad) f32 -> (M, Cout_pad) bf16."""
    M, coutp = y.shape
    bm = _pick_div_tile(M, 1024, 8)
    bn = _pick_div_tile(coutp, 512, 128)
    grid = (M // bm, coutp // bn)
    return pl.pallas_call(
        _bn_relu_kernel,
        out_shape=jax.ShapeDtypeStruct((M, coutp), jnp.bfloat16),
        grid=grid,
        in_specs=[
            pl.BlockSpec((bm, bn), lambda i, j: (i, j)),
            pl.BlockSpec((1, bn), lambda i, j: (0, j)),
            pl.BlockSpec((1, bn), lambda i, j: (0, j)),
        ],
        out_specs=pl.BlockSpec((bm, bn), lambda i, j: (i, j)),
        compiler_params=pltpu.CompilerParams(
            dimension_semantics=("parallel", "parallel")),
    )(y, scale, shift)


def _bn_scale_shift(stats, gamma, beta, m_rows):
    """Tiny O(Cout) reduction of the per-tile partials -> training-mode BatchNorm2d
    affine (biased batch variance, matching PyTorch BN in train mode)."""
    s = jnp.sum(stats[0::8], axis=0, keepdims=True)      # (1, Cout_pad)
    ss = jnp.sum(stats[1::8], axis=0, keepdims=True)
    mean = s / m_rows
    var = jnp.maximum(ss / m_rows - mean * mean, 0.0)
    inv = lax.rsqrt(var + _BN_EPS)
    scale = gamma * inv
    shift = beta - mean * scale
    return scale, shift


# --------------------------------------------------------------------------------------
# Conv glue (im2col in bf16); the contraction itself runs in the kernels above.
# --------------------------------------------------------------------------------------
def _im2col(x_nhwc, kh, kw, stride, padding):
    if padding:
        x_nhwc = jnp.pad(
            x_nhwc, ((0, 0), (padding, padding), (padding, padding), (0, 0)))
    N, H, W, C = x_nhwc.shape
    OH = (H - kh) // stride + 1
    OW = (W - kw) // stride + 1
    cols = []
    for i in range(kh):
        for j in range(kw):
            cols.append(x_nhwc[:, i:i + stride * OH:stride, j:j + stride * OW:stride, :])
    patches = jnp.stack(cols, axis=3)                  # (N, OH, OW, KH*KW, C)
    return patches.reshape(N * OH * OW, kh * kw * C), OH, OW


# --------------------------------------------------------------------------------------
# Parameter construction: weights are packed / padded / cast to bf16 ONCE here, so the
# forward path never re-lays-out parameters.
# --------------------------------------------------------------------------------------
def _pack_conv_weight(w_oihw, cin_carried, cout_pad):
    """(Cout, Cin, kh, kw) PyTorch layout -> (kh*kw*cin_carried, cout_pad) bf16.
    Zero rows/cols for padded channels so they contribute exactly 0."""
    cout, cin, kh, kw = w_oihw.shape
    w = jnp.transpose(w_oihw, (2, 3, 1, 0))            # (kh, kw, cin, cout)
    w = jnp.pad(w, ((0, 0), (0, 0), (0, cin_carried - cin), (0, cout_pad - cout)))
    return w.reshape(kh * kw * cin_carried, cout_pad).astype(jnp.bfloat16)


def init_discriminator(key, x_dim, image_channel, d_hidden):
    n_layers = int(np.log2(x_dim // 4))
    layers = []

    # first hidden layer: Conv(image_channel -> d_hidden, 4, 2, 1, bias=False) + ReLU.
    # Input channels padded to a multiple of 8 so K = 16*Cin_pad is lane-dense (128k).
    key, sub = jax.random.split(key)
    w0 = 0.02 * jax.random.normal(sub, (d_hidden, image_channel, 4, 4), jnp.float32)
    cin0_pad = _round_up(image_channel, 8)
    cout_pad = _round_up(d_hidden, _LANE)
    layers.append({"w_mat": _pack_conv_weight(w0, cin0_pad, cout_pad)})
    cin, cin_pad = d_hidden, cout_pad

    # middle hidden layers: Conv(k4, s2, p1, bias=False) + BatchNorm2d + ReLU
    p = 1
    for _ in range(n_layers):
        key, k_w, k_g = jax.random.split(key, 3)
        cout = d_hidden * p * 2
        cout_pad = _round_up(cout, _LANE)
        w = 0.02 * jax.random.normal(k_w, (cout, cin, 4, 4), jnp.float32)
        gamma = jnp.zeros((1, cout_pad), jnp.float32).at[:, :cout].set(
            1.0 + 0.02 * jax.random.normal(k_g, (1, cout), jnp.float32))
        beta = jnp.zeros((1, cout_pad), jnp.float32)
        layers.append({"w_mat": _pack_conv_weight(w, cin_pad, cout_pad),
                       "gamma": gamma, "beta": beta})
        cin, cin_pad = cout, cout_pad
        p *= 2

    # final layer: Conv(d_hidden * p -> 1, 4, 1, 0, bias=False) + Sigmoid (see TODO at
    # top about the 2x2 feature map).
    key, sub = jax.random.split(key)
    w_last = 0.02 * jax.random.normal(sub, (1, cin, 4, 4), jnp.float32)
    final_hw = x_dim // (2 ** (1 + n_layers))
    ks = min(4, final_hw)
    assert ks == final_hw, "final layer only collapses a <=4x4 map to 1x1"
    w_eff = w_last[0, :, :ks, :ks]                     # (cin, ks, ks)
    w_vec = jnp.zeros((ks, ks, cin_pad), jnp.float32)
    w_vec = w_vec.at[:, :, :cin].set(jnp.transpose(w_eff, (1, 2, 0)))
    layers.append({"w_vec": w_vec.reshape(-1)})
    return layers


# --------------------------------------------------------------------------------------
# Forward pass
# --------------------------------------------------------------------------------------
def discriminator_forward(params, x_nchw):
    x = jnp.transpose(x_nchw, (0, 2, 3, 1)).astype(jnp.bfloat16)   # NCHW -> NHWC, bf16
    n = x.shape[0]

    # pad image channels to a multiple of 8 -> layer-0 patch width is a multiple of 128
    cin0_pad = _round_up(x.shape[-1], 8)
    if cin0_pad != x.shape[-1]:
        x = jnp.pad(x, ((0, 0), (0, 0), (0, 0), (0, cin0_pad - x.shape[-1])))

    # first hidden layer: Conv(k4, s2, p1) + ReLU
    patches, oh, ow = _im2col(x, 4, 4, 2, 1)
    y = conv_gemm_relu(patches, params[0]["w_mat"])
    x = y.reshape(n, oh, ow, y.shape[-1])

    # middle hidden layers: Conv(k4, s2, p1) + BatchNorm2d (train-mode stats) + ReLU
    # pass 1 (GEMM + per-tile stats) -> tiny jnp stat reduction -> pass 2 (apply + ReLU)
    for layer in params[1:-1]:
        patches, oh, ow = _im2col(x, 4, 4, 2, 1)
        y, stats = conv_gemm_stats(patches, layer["w_mat"])
        scale, shift = _bn_scale_shift(stats, layer["gamma"], layer["beta"],
                                       patches.shape[0])
        y = bn_relu_apply(y, scale, shift)
        x = y.reshape(n, oh, ow, y.shape[-1])

    # final layer: global collapse + Sigmoid, done in plain jnp (Cout == 1; a 1-wide
    # Pallas GEMM would be all masked stores and per-call overhead).
    logits = jnp.dot(x.reshape(n, -1).astype(jnp.float32), params[-1]["w_vec"])
    return jax.nn.sigmoid(logits)          # == .view(-1, 1).squeeze(1)


if __name__ == "__main__":
    batch, image_channel, x_dim, d_hidden = 2, 4, 16, 8
    key = jax.random.PRNGKey(0)
    key, pkey, xkey = jax.random.split(key, 3)

    params = init_discriminator(pkey, x_dim, image_channel, d_hidden)
    x = jax.random.normal(xkey, (batch, image_channel, x_dim, x_dim), jnp.float32)

    fwd = jax.jit(discriminator_forward)
    out = jax.block_until_ready(fwd(params, x))

    assert out.shape == (batch,), out.shape
    assert bool(jnp.all(jnp.isfinite(out)))
    assert bool(jnp.all((out >= 0.0) & (out <= 1.0)))
    print("KERNEL_OK")
</pallas_src>

<mosaic_0001>
module attributes {stable_mosaic.version = 11 : i64} {
  func.func @_gemm_relu_kernel(%arg0: i32, %arg1: i32, %arg2: i32, %arg3: memref<128x128xbf16, #tpu.memory_space<vmem>>, %arg4: memref<128x128xbf16, #tpu.memory_space<vmem>>, %arg5: memref<128x128xbf16, #tpu.memory_space<vmem>>, %arg6: memref<128x128xf32, #tpu.memory_space<vmem>>) attributes {dimension_semantics = [#tpu.dimension_semantics<parallel>, #tpu.dimension_semantics<parallel>, #tpu.dimension_semantics<arbitrary>], iteration_bounds = array<i64: 1, 1, 1>, scalar_prefetch = 0 : i64, scratch_operands = 1 : i64, tpu.core_type = #tpu.core_type<tc>, window_params = [{transform_indices = @transform_0, window_bounds = array<i64: 128, 128>}, {transform_indices = @transform_1, window_bounds = array<i64: 128, 128>}, {transform_indices = @transform_2, window_bounds = array<i64: 128, 128>}]} {
    %c0_i32 = arith.constant 0 : i32
    %0 = arith.cmpi eq, %arg2, %c0_i32 : i32
    %1 = arith.extui %0 : i1 to i32
    %c0_i32_0 = arith.constant 0 : i32
    %2 = arith.cmpi ne, %1, %c0_i32_0 : i32
    scf.if %2 {
      %cst_10 = arith.constant 0.000000e+00 : f32
      %12 = vector.broadcast %cst_10 : f32 to vector<128x128xf32>
      %c0_11 = arith.constant 0 : index
      %c0_12 = arith.constant 0 : index
      %13 = vector.load %arg6[%c0_11, %c0_12] : memref<128x128xf32, #tpu.memory_space<vmem>>, vector<128x128xf32>
      tpu.vector_store %arg6[%c0_11, %c0_12], %12 {strides = array<i32>} : memref<128x128xf32, #tpu.memory_space<vmem>>, vector<128x128xf32>,
    } else {
    }
    %c0 = arith.constant 0 : index
    %c0_1 = arith.constant 0 : index
    %3 = vector.load %arg6[%c0, %c0_1] : memref<128x128xf32, #tpu.memory_space<vmem>>, vector<128x128xf32>
    %c0_2 = arith.constant 0 : index
    %c0_3 = arith.constant 0 : index
    %4 = vector.load %arg3[%c0_2, %c0_3] : memref<128x128xbf16, #tpu.memory_space<vmem>>, vector<128x128xbf16>
    %c0_4 = arith.constant 0 : index
    %c0_5 = arith.constant 0 : index
    %5 = vector.load %arg4[%c0_4, %c0_5] : memref<128x128xbf16, #tpu.memory_space<vmem>>, vector<128x128xbf16>
    %cst = arith.constant dense<0.000000e+00> : vector<128x128xf32>
    %6 = tpu.matmul %4, %5, %cst {dimension_numbers = #tpu.dot_dimension_numbers<[1], [0], [0], [1], [0, 0, 1, 1], [], []>} : vector<128x128xbf16>, vector<128x128xbf16>, vector<128x128xf32> -> vector<128x128xf32>
    %7 = arith.addf %3, %6 : vector<128x128xf32>
    %c0_6 = arith.constant 0 : index
    %c0_7 = arith.constant 0 : index
    %8 = vector.load %arg6[%c0_6, %c0_7] : memref<128x128xf32, #tpu.memory_space<vmem>>, vector<128x128xf32>
    tpu.vector_store %arg6[%c0_6, %c0_7], %7 {strides = array<i32>} : memref<128x128xf32, #tpu.memory_space<vmem>>, vector<128x128xf32>,
    %c0_i32_8 = arith.constant 0 : i32
    %9 = arith.cmpi eq, %arg2, %c0_i32_8 : i32
    %10 = arith.extui %9 : i1 to i32
    %c0_i32_9 = arith.constant 0 : i32
    %11 = arith.cmpi ne, %10, %c0_i32_9 : i32
    scf.if %11 {
      %c0_10 = arith.constant 0 : index
      %c0_11 = arith.constant 0 : index
      %12 = vector.load %arg6[%c0_10, %c0_11] : memref<128x128xf32, #tpu.memory_space<vmem>>, vector<128x128xf32>
      %cst_12 = arith.constant 0.000000e+00 : f32
      %13 = vector.broadcast %cst_12 : f32 to vector<128x128xf32>
      %14 = arith.maximumf %12, %13 : vector<128x128xf32>
      %15 = arith.truncf %14 : vector<128x128xf32> to vector<128x128xbf16>
      %c0_13 = arith.constant 0 : index
      %c0_14 = arith.constant 0 : index
      %16 = vector.load %arg5[%c0_13, %c0_14] : memref<128x128xbf16, #tpu.memory_space<vmem>>, vector<128x128xbf16>
      tpu.vector_store %arg5[%c0_13, %c0_14], %15 {strides = array<i32>} : memref<128x128xbf16, #tpu.memory_space<vmem>>, vector<128x128xbf16>,
    } else {
    }
    return
  }
  func.func @transform_0(%arg0: i32, %arg1: i32, %arg2: i32) -> (i32, i32) {
    %c0_i32 = arith.constant 0 : i32
    return %arg0, %arg2 : i32, i32
  }
  func.func @transform_1(%arg0: i32, %arg1: i32, %arg2: i32) -> (i32, i32) {
    %c0_i32 = arith.constant 0 : i32
    return %arg2, %arg1 : i32, i32
  }
  func.func @transform_2(%arg0: i32, %arg1: i32, %arg2: i32) -> (i32, i32) {
    %c0_i32 = arith.constant 0 : i32
    return %arg0, %arg1 : i32, i32
  }
}

module attributes {stable_mosaic.version = 11 : i64} {
  func.func @_gemm_stats_kernel(%arg0: i32, %arg1: i32, %arg2: i32, %arg3: memref<32x512xbf16, #tpu.memory_space<vmem>>, %arg4: memref<512x128xbf16, #tpu.memory_space<vmem>>, %arg5: memref<32x128xbf16, #tpu.memory_space<vmem>>, %arg6: memref<8x128xf32, #tpu.memory_space<vmem>>, %arg7: memref<32x128xf32, #tpu.memory_space<vmem>>) attributes {dimension_semantics = [#tpu.dimension_semantics<parallel>, #tpu.dimension_semantics<parallel>, #tpu.dimension_semantics<arbitrary>], iteration_bounds = array<i64: 1, 1, 4>, scalar_prefetch = 0 : i64, scratch_operands = 1 : i64, tpu.core_type = #tpu.core_type<tc>, window_params = [{transform_indices = @transform_0, window_bounds = array<i64: 32, 512>}, {transform_indices = @transform_1, window_bounds = array<i64: 512, 128>}, {transform_indices = @transform_2, window_bounds = array<i64: 32, 128>}, {transform_indices = @transform_3, window_bounds = array<i64: 8, 128>}]} {
    %c0_i32 = arith.constant 0 : i32
    %0 = arith.cmpi eq, %arg2, %c0_i32 : i32
    %1 = arith.extui %0 : i1 to i32
    %c0_i32_0 = arith.constant 0 : i32
    %2 = arith.cmpi ne, %1, %c0_i32_0 : i32
    scf.if %2 {
      %cst_9 = arith.constant 0.000000e+00 : f32
      %12 = vector.broadcast %cst_9 : f32 to vector<32x128xf32>
      %c0_10 = arith.constant 0 : index
      %c0_11 = arith.constant 0 : index
      %13 = vector.load %arg7[%c0_10, %c0_11] : memref<32x128xf32, #tpu.memory_space<vmem>>, vector<32x128xf32>
      tpu.vector_store %arg7[%c0_10, %c0_11], %12 {strides = array<i32>} : memref<32x128xf32, #tpu.memory_space<vmem>>, vector<32x128xf32>,
    } else {
    }
    %c0 = arith.constant 0 : index
    %c0_1 = arith.constant 0 : index
    %3 = vector.load %arg7[%c0, %c0_1] : memref<32x128xf32, #tpu.memory_space<vmem>>, vector<32x128xf32>
    %c0_2 = arith.constant 0 : index
    %c0_3 = arith.constant 0 : index
    %4 = vector.load %arg3[%c0_2, %c0_3] : memref<32x512xbf16, #tpu.memory_space<vmem>>, vector<32x512xbf16>
    %c0_4 = arith.constant 0 : index
    %c0_5 = arith.constant 0 : index
    %5 = vector.load %arg4[%c0_4, %c0_5] : memref<512x128xbf16, #tpu.memory_space<vmem>>, vector<512x128xbf16>
    %cst = arith.constant dense<0.000000e+00> : vector<32x128xf32>
    %6 = tpu.matmul %4, %5, %cst {dimension_numbers = #tpu.dot_dimension_numbers<[1], [0], [0], [1], [0, 0, 1, 1], [], []>} : vector<32x512xbf16>, vector<512x128xbf16>, vector<32x128xf32> -> vector<32x128xf32>
    %7 = arith.addf %3, %6 : vector<32x128xf32>
    %c0_6 = arith.constant 0 : index
    %c0_7 = arith.constant 0 : index
    %8 = vector.load %arg7[%c0_6, %c0_7] : memref<32x128xf32, #tpu.memory_space<vmem>>, vector<32x128xf32>
    tpu.vector_store %arg7[%c0_6, %c0_7], %7 {strides = array<i32>} : memref<32x128xf32, #tpu.memory_space<vmem>>, vector<32x128xf32>,
    %c3_i32 = arith.constant 3 : i32
    %9 = arith.cmpi eq, %arg2, %c3_i32 : i32
    %10 = arith.extui %9 : i1 to i32
    %c0_i32_8 = arith.constant 0 : i32
    %11 = arith.cmpi ne, %10, %c0_i32_8 : i32
    scf.if %11 {
      %c0_9 = arith.constant 0 : index
      %c0_10 = arith.constant 0 : index
      %12 = vector.load %arg7[%c0_9, %c0_10] : memref<32x128xf32, #tpu.memory_space<vmem>>, vector<32x128xf32>
      %13 = arith.truncf %12 : vector<32x128xf32> to vector<32x128xbf16>
      %c0_11 = arith.constant 0 : index
      %c0_12 = arith.constant 0 : index
      %14 = vector.load %arg5[%c0_11, %c0_12] : memref<32x128xbf16, #tpu.memory_space<vmem>>, vector<32x128xbf16>
      tpu.vector_store %arg5[%c0_11, %c0_12], %13 {strides = array<i32>} : memref<32x128xbf16, #tpu.memory_space<vmem>>, vector<32x128xbf16>,
      %cst_13 = arith.constant dense<0.000000e+00> : vector<128xf32>
      %15 = vector.multi_reduction <add>, %12, %cst_13 [0] : vector<32x128xf32> to vector<128xf32>
      %16 = vector.shape_cast %15 : vector<128xf32> to vector<1x128xf32>
      %17 = arith.mulf %12, %12 : vector<32x128xf32>
      %cst_14 = arith.constant dense<0.000000e+00> : vector<128xf32>
      %18 = vector.multi_reduction <add>, %17, %cst_14 [0] : vector<32x128xf32> to vector<128xf32>
      %19 = vector.shape_cast %18 : vector<128xf32> to vector<1x128xf32>
      %20 = tpu.iota {dimensions = array<i32: 0>} : vector<8x128xi32>
      %c0_i32_15 = arith.constant 0 : i32
      %21 = vector.broadcast %c0_i32_15 : i32 to vector<8x128xi32>
      %22 = arith.cmpi eq, %20, %21 : vector<8x128xi32>
      %c1_i32 = arith.constant 1 : i32
      %23 = vector.broadcast %c1_i32 : i32 to vector<8x128xi32>
      %24 = arith.cmpi eq, %20, %23 : vector<8x128xi32>
      %cst_16 = arith.constant 0.000000e+00 : f32
      %25 = vector.shape_cast %19 : vector<1x128xf32> to vector<1x128xf32>
      %26 = vector.broadcast %25 : vector<1x128xf32> to vector<8x128xf32>
      %27 = vector.broadcast %cst_16 : f32 to vector<8x128xf32>
      %28 = arith.select %24, %26, %27 : vector<8x128xi1>, vector<8x128xf32>
      %29 = vector.shape_cast %16 : vector<1x128xf32> to vector<1x128xf32>
      %30 = vector.broadcast %29 : vector<1x128xf32> to vector<8x128xf32>
      %31 = arith.select %22, %30, %28 : vector<8x128xi1>, vector<8x128xf32>
      %c0_17 = arith.constant 0 : index
      %c0_18 = arith.constant 0 : index
      %32 = vector.load %arg6[%c0_17, %c0_18] : memref<8x128xf32, #tpu.memory_space<vmem>>, vector<8x128xf32>
      tpu.vector_store %arg6[%c0_17, %c0_18], %31 {strides = array<i32>} : memref<8x128xf32, #tpu.memory_space<vmem>>, vector<8x128xf32>,
    } else {
    }
    return
  }
  func.func @transform_0(%arg0: i32, %arg1: i32, %arg2: i32) -> (i32, i32) {
    %c0_i32 = arith.constant 0 : i32
    return %arg0, %arg2 : i32, i32
  }
  func.func @transform_1(%arg0: i32, %arg1: i32, %arg2: i32) -> (i32, i32) {
    %c0_i32 = arith.constant 0 : i32
    return %arg2, %arg1 : i32, i32
  }
  func.func @transform_2(%arg0: i32, %arg1: i32, %arg2: i32) -> (i32, i32) {
    %c0_i32 = arith.constant 0 : i32
    return %arg0, %arg1 : i32, i32
  }
  func.func @transform_3(%arg0: i32, %arg1: i32, %arg2: i32) -> (i32, i32) {
    %c0_i32 = arith.constant 0 : i32
    return %arg0, %arg1 : i32, i32
  }
}

module attributes {stable_mosaic.version = 11 : i64} {
  func.func @_bn_relu_kernel(%arg0: i32, %arg1: i32, %arg2: memref<32x128xbf16, #tpu.memory_space<vmem>>, %arg3: memref<1x128xf32, #tpu.memory_space<vmem>>, %arg4: memref<1x128xf32, #tpu.memory_space<vmem>>, %arg5: memref<32x128xbf16, #tpu.memory_space<vmem>>) attributes {dimension_semantics = [#tpu.dimension_semantics<parallel>, #tpu.dimension_semantics<parallel>], iteration_bounds = array<i64: 1, 1>, scalar_prefetch = 0 : i64, scratch_operands = 0 : i64, tpu.core_type = #tpu.core_type<tc>, window_params = [{transform_indices = @transform_0, window_bounds = array<i64: 32, 128>}, {transform_indices = @transform_1, window_bounds = array<i64: 1, 128>}, {transform_indices = @transform_2, window_bounds = array<i64: 1, 128>}, {transform_indices = @transform_3, window_bounds = array<i64: 32, 128>}]} {
    %c0 = arith.constant 0 : index
    %c0_0 = arith.constant 0 : index
    %0 = vector.load %arg2[%c0, %c0_0] : memref<32x128xbf16, #tpu.memory_space<vmem>>, vector<32x128xbf16>
    %1 = arith.extf %0 : vector<32x128xbf16> to vector<32x128xf32>
    %c0_1 = arith.constant 0 : index
    %c0_2 = arith.constant 0 : index
    %2 = vector.load %arg3[%c0_1, %c0_2] : memref<1x128xf32, #tpu.memory_space<vmem>>, vector<1x128xf32>
    %3 = vector.broadcast %2 : vector<1x128xf32> to vector<32x128xf32>
    %4 = arith.mulf %1, %3 : vector<32x128xf32>
    %c0_3 = arith.constant 0 : index
    %c0_4 = arith.constant 0 : index
    %5 = vector.load %arg4[%c0_3, %c0_4] : memref<1x128xf32, #tpu.memory_space<vmem>>, vector<1x128xf32>
    %6 = vector.broadcast %5 : vector<1x128xf32> to vector<32x128xf32>
    %7 = arith.addf %4, %6 : vector<32x128xf32>
    %cst = arith.constant 0.000000e+00 : f32
    %8 = vector.broadcast %cst : f32 to vector<32x128xf32>
    %9 = arith.maximumf %7, %8 : vector<32x128xf32>
    %10 = arith.truncf %9 : vector<32x128xf32> to vector<32x128xbf16>
    %c0_5 = arith.constant 0 : index
    %c0_6 = arith.constant 0 : index
    %11 = vector.load %arg5[%c0_5, %c0_6] : memref<32x128xbf16, #tpu.memory_space<vmem>>, vector<32x128xbf16>
    tpu.vector_store %arg5[%c0_5, %c0_6], %10 {strides = array<i32>} : memref<32x128xbf16, #tpu.memory_space<vmem>>, vector<32x128xbf16>,
    return
  }
  func.func @transform_0(%arg0: i32, %arg1: i32) -> (i32, i32) {
    %c0_i32 = arith.constant 0 : i32
    return %arg0, %arg1 : i32, i32
  }
  func.func @transform_1(%arg0: i32, %arg1: i32) -> (i32, i32) {
    %c0_i32 = arith.constant 0 : i32
    %c0_i32_0 = arith.constant 0 : i32
    return %c0_i32, %arg1 : i32, i32
  }
  func.func @transform_2(%arg0: i32, %arg1: i32) -> (i32, i32) {
    %c0_i32 = arith.constant 0 : i32
    %c0_i32_0 = arith.constant 0 : i32
    return %c0_i32, %arg1 : i32, i32
  }
  func.func @transform_3(%arg0: i32, %arg1: i32) -> (i32, i32) {
    %c0_i32 = arith.constant 0 : i32
    return %arg0, %arg1 : i32, i32
  }
}

module attributes {stable_mosaic.version = 11 : i64} {
  func.func @_bn_relu_kernel(%arg0: i32, %arg1: i32, %arg2: memref<8x128xbf16, #tpu.memory_space<vmem>>, %arg3: memref<1x128xf32, #tpu.memory_space<vmem>>, %arg4: memref<1x128xf32, #tpu.memory_space<vmem>>, %arg5: memref<8x128xbf16, #tpu.memory_space<vmem>>) attributes {dimension_semantics = [#tpu.dimension_semantics<parallel>, #tpu.dimension_semantics<parallel>], iteration_bounds = array<i64: 1, 1>, scalar_prefetch = 0 : i64, scratch_operands = 0 : i64, tpu.core_type = #tpu.core_type<tc>, window_params = [{transform_indices = @transform_0, window_bounds = array<i64: 8, 128>}, {transform_indices = @transform_1, window_bounds = array<i64: 1, 128>}, {transform_indices = @transform_2, window_bounds = array<i64: 1, 128>}, {transform_indices = @transform_3, window_bounds = array<i64: 8, 128>}]} {
    %c0 = arith.constant 0 : index
    %c0_0 = arith.constant 0 : index
    %0 = vector.load %arg2[%c0, %c0_0] : memref<8x128xbf16, #tpu.memory_space<vmem>>, vector<8x128xbf16>
    %1 = arith.extf %0 : vector<8x128xbf16> to vector<8x128xf32>
    %c0_1 = arith.constant 0 : index
    %c0_2 = arith.constant 0 : index
    %2 = vector.load %arg3[%c0_1, %c0_2] : memref<1x128xf32, #tpu.memory_space<vmem>>, vector<1x128xf32>
    %3 = vector.broadcast %2 : vector<1x128xf32> to vector<8x128xf32>
    %4 = arith.mulf %1, %3 : vector<8x128xf32>
    %c0_3 = arith.constant 0 : index
    %c0_4 = arith.constant 0 : index
    %5 = vector.load %arg4[%c0_3, %c0_4] : memref<1x128xf32, #tpu.memory_space<vmem>>, vector<1x128xf32>
    %6 = vector.broadcast %5 : vector<1x128xf32> to vector<8x128xf32>
    %7 = arith.addf %4, %6 : vector<8x128xf32>
    %cst = arith.constant 0.000000e+00 : f32
    %8 = vector.broadcast %cst : f32 to vector<8x128xf32>
    %9 = arith.maximumf %7, %8 : vector<8x128xf32>
    %10 = arith.truncf %9 : vector<8x128xf32> to vector<8x128xbf16>
    %c0_5 = arith.constant 0 : index
    %c0_6 = arith.constant 0 : index
    %11 = vector.load %arg5[%c0_5, %c0_6] : memref<8x128xbf16, #tpu.memory_space<vmem>>, vector<8x128xbf16>
    tpu.vector_store %arg5[%c0_5, %c0_6], %10 {strides = array<i32>} : memref<8x128xbf16, #tpu.memory_space<vmem>>, vector<8x128xbf16>,
    return
  }
  func.func @transform_0(%arg0: i32, %arg1: i32) -> (i32, i32) {
    %c0_i32 = arith.constant 0 : i32
    return %arg0, %arg1 : i32, i32
  }
  func.func @transform_1(%arg0: i32, %arg1: i32) -> (i32, i32) {
    %c0_i32 = arith.constant 0 : i32
    %c0_i32_0 = arith.constant 0 : i32
    return %c0_i32, %arg1 : i32, i32
  }
  func.func @transform_2(%arg0: i32, %arg1: i32) -> (i32, i32) {
    %c0_i32 = arith.constant 0 : i32
    %c0_i32_0 = arith.constant 0 : i32
    return %c0_i32, %arg1 : i32, i32
  }
  func.func @transform_3(%arg0: i32, %arg1: i32) -> (i32, i32) {
    %c0_i32 = arith.constant 0 : i32
    return %arg0, %arg1 : i32, i32
  }
}

module attributes {stable_mosaic.version = 11 : i64} {
  func.func @_gemm_stats_kernel(%arg0: i32, %arg1: i32, %arg2: i32, %arg3: memref<8x512xbf16, #tpu.memory_space<vmem>>, %arg4: memref<512x128xbf16, #tpu.memory_space<vmem>>, %arg5: memref<8x128xbf16, #tpu.memory_space<vmem>>, %arg6: memref<8x128xf32, #tpu.memory_space<vmem>>, %arg7: memref<8x128xf32, #tpu.memory_space<vmem>>) attributes {dimension_semantics = [#tpu.dimension_semantics<parallel>, #tpu.dimension_semantics<parallel>, #tpu.dimension_semantics<arbitrary>], iteration_bounds = array<i64: 1, 1, 4>, scalar_prefetch = 0 : i64, scratch_operands = 1 : i64, tpu.core_type = #tpu.core_type<tc>, window_params = [{transform_indices = @transform_0, window_bounds = array<i64: 8, 512>}, {transform_indices = @transform_1, window_bounds = array<i64: 512, 128>}, {transform_indices = @transform_2, window_bounds = array<i64: 8, 128>}, {transform_indices = @transform_3, window_bounds = array<i64: 8, 128>}]} {
    %c0_i32 = arith.constant 0 : i32
    %0 = arith.cmpi eq, %arg2, %c0_i32 : i32
    %1 = arith.extui %0 : i1 to i32
    %c0_i32_0 = arith.constant 0 : i32
    %2 = arith.cmpi ne, %1, %c0_i32_0 : i32
    scf.if %2 {
      %cst_9 = arith.constant 0.000000e+00 : f32
      %12 = vector.broadcast %cst_9 : f32 to vector<8x128xf32>
      %c0_10 = arith.constant 0 : index
      %c0_11 = arith.constant 0 : index
      %13 = vector.load %arg7[%c0_10, %c0_11] : memref<8x128xf32, #tpu.memory_space<vmem>>, vector<8x128xf32>
      tpu.vector_store %arg7[%c0_10, %c0_11], %12 {strides = array<i32>} : memref<8x128xf32, #tpu.memory_space<vmem>>, vector<8x128xf32>,
    } else {
    }
    %c0 = arith.constant 0 : index
    %c0_1 = arith.constant 0 : index
    %3 = vector.load %arg7[%c0, %c0_1] : memref<8x128xf32, #tpu.memory_space<vmem>>, vector<8x128xf32>
    %c0_2 = arith.constant 0 : index
    %c0_3 = arith.constant 0 : index
    %4 = vector.load %arg3[%c0_2, %c0_3] : memref<8x512xbf16, #tpu.memory_space<vmem>>, vector<8x512xbf16>
    %c0_4 = arith.constant 0 : index
    %c0_5 = arith.constant 0 : index
    %5 = vector.load %arg4[%c0_4, %c0_5] : memref<512x128xbf16, #tpu.memory_space<vmem>>, vector<512x128xbf16>
    %cst = arith.constant dense<0.000000e+00> : vector<8x128xf32>
    %6 = tpu.matmul %4, %5, %cst {dimension_numbers = #tpu.dot_dimension_numbers<[1], [0], [0], [1], [0, 0, 1, 1], [], []>} : vector<8x512xbf16>, vector<512x128xbf16>, vector<8x128xf32> -> vector<8x128xf32>
    %7 = arith.addf %3, %6 : vector<8x128xf32>
    %c0_6 = arith.constant 0 : index
    %c0_7 = arith.constant 0 : index
    %8 = vector.load %arg7[%c0_6, %c0_7] : memref<8x128xf32, #tpu.memory_space<vmem>>, vector<8x128xf32>
    tpu.vector_store %arg7[%c0_6, %c0_7], %7 {strides = array<i32>} : memref<8x128xf32, #tpu.memory_space<vmem>>, vector<8x128xf32>,
    %c3_i32 = arith.constant 3 : i32
    %9 = arith.cmpi eq, %arg2, %c3_i32 : i32
    %10 = arith.extui %9 : i1 to i32
    %c0_i32_8 = arith.constant 0 : i32
    %11 = arith.cmpi ne, %10, %c0_i32_8 : i32
    scf.if %11 {
      %c0_9 = arith.constant 0 : index
      %c0_10 = arith.constant 0 : index
      %12 = vector.load %arg7[%c0_9, %c0_10] : memref<8x128xf32, #tpu.memory_space<vmem>>, vector<8x128xf32>
      %13 = arith.truncf %12 : vector<8x128xf32> to vector<8x128xbf16>
      %c0_11 = arith.constant 0 : index
      %c0_12 = arith.constant 0 : index
      %14 = vector.load %arg5[%c0_11, %c0_12] : memref<8x128xbf16, #tpu.memory_space<vmem>>, vector<8x128xbf16>
      tpu.vector_store %arg5[%c0_11, %c0_12], %13 {strides = array<i32>} : memref<8x128xbf16, #tpu.memory_space<vmem>>, vector<8x128xbf16>,
      %cst_13 = arith.constant dense<0.000000e+00> : vector<128xf32>
      %15 = vector.multi_reduction <add>, %12, %cst_13 [0] : vector<8x128xf32> to vector<128xf32>
      %16 = vector.shape_cast %15 : vector<128xf32> to vector<1x128xf32>
      %17 = arith.mulf %12, %12 : vector<8x128xf32>
      %cst_14 = arith.constant dense<0.000000e+00> : vector<128xf32>
      %18 = vector.multi_reduction <add>, %17, %cst_14 [0] : vector<8x128xf32> to vector<128xf32>
      %19 = vector.shape_cast %18 : vector<128xf32> to vector<1x128xf32>
      %20 = tpu.iota {dimensions = array<i32: 0>} : vector<8x128xi32>
      %c0_i32_15 = arith.constant 0 : i32
      %21 = vector.broadcast %c0_i32_15 : i32 to vector<8x128xi32>
      %22 = arith.cmpi eq, %20, %21 : vector<8x128xi32>
      %c1_i32 = arith.constant 1 : i32
      %23 = vector.broadcast %c1_i32 : i32 to vector<8x128xi32>
      %24 = arith.cmpi eq, %20, %23 : vector<8x128xi32>
      %cst_16 = arith.constant 0.000000e+00 : f32
      %25 = vector.shape_cast %19 : vector<1x128xf32> to vector<1x128xf32>
      %26 = vector.broadcast %25 : vector<1x128xf32> to vector<8x128xf32>
      %27 = vector.broadcast %cst_16 : f32 to vector<8x128xf32>
      %28 = arith.select %24, %26, %27 : vector<8x128xi1>, vector<8x128xf32>
      %29 = vector.shape_cast %16 : vector<1x128xf32> to vector<1x128xf32>
      %30 = vector.broadcast %29 : vector<1x128xf32> to vector<8x128xf32>
      %31 = arith.select %22, %30, %28 : vector<8x128xi1>, vector<8x128xf32>
      %c0_17 = arith.constant 0 : index
      %c0_18 = arith.constant 0 : index
      %32 = vector.load %arg6[%c0_17, %c0_18] : memref<8x128xf32, #tpu.memory_space<vmem>>, vector<8x128xf32>
      tpu.vector_store %arg6[%c0_17, %c0_18], %31 {strides = array<i32>} : memref<8x128xf32, #tpu.memory_space<vmem>>, vector<8x128xf32>,
    } else {
    }
    return
  }
  func.func @transform_0(%arg0: i32, %arg1: i32, %arg2: i32) -> (i32, i32) {
    %c0_i32 = arith.constant 0 : i32
    return %arg0, %arg2 : i32, i32
  }
  func.func @transform_1(%arg0: i32, %arg1: i32, %arg2: i32) -> (i32, i32) {
    %c0_i32 = arith.constant 0 : i32
    return %arg2, %arg1 : i32, i32
  }
  func.func @transform_2(%arg0: i32, %arg1: i32, %arg2: i32) -> (i32, i32) {
    %c0_i32 = arith.constant 0 : i32
    return %arg0, %arg1 : i32, i32
  }
  func.func @transform_3(%arg0: i32, %arg1: i32, %arg2: i32) -> (i32, i32) {
    %c0_i32 = arith.constant 0 : i32
    return %arg0, %arg1 : i32, i32
  }
}

</mosaic_0001>

<llo_original>
// kernel: discriminator_forward.5
$region0: #{discriminator_forward.5}
  #allocation0 [shape = 'u32[]', space=smem, size = 0x4, offset = 0x4, fixed_abs, tag = 'smem constant byte address 0x4 - core index']
  #allocation1 [shape = 'u32[144,128]{1,0:T(1,128)}', space=vmem, size = 0x12000, scoped, tag = 'internal scratch']
  #allocation2 [shape = 'f32[128,128]{1,0:T(8,128)}', space=vmem, size = 0x10000, scoped, tag = 'scratch operand']
  %s0 = inlined_call_operand.vmem [shape: bf16[128,128], index: 0, kind: input, shape index: {}]
  %s1 = inlined_call_operand.vmem [shape: bf16[128,128], index: 1, kind: input, shape index: {}]
  %s2 = inlined_call_operand.vmem [shape: bf16[128,128], index: 2, kind: output, shape index: {}]
  %s3 = sld [smem:[#allocation0]]
  $region26: #{discriminator_forward.5} parent=0
    _
  %s5 = ssub.s32 1, %s3
  %s6 = scalar_select 0, %s5, %s3
  // Predicated region
  $region2: #{discriminator_forward.5} parent=0 // pred_check
    _
  $region3: #{discriminator_forward.5} parent=0 // pred_check_branch
    %8 = sbr.rel (0) target = $region5
  $region4: #{discriminator_forward.5} parent=0 // pred_region
    _
  $region5: #{discriminator_forward.5} parent=0 // pred_fallthru
    _
  // Predicated region
  $region6: #{discriminator_forward.5} parent=0 // pred_check
    _
  $region7: #{discriminator_forward.5} parent=0 // pred_check_branch
    %10 = sbr.rel (0) target = $region9
  $region8: #{discriminator_forward.5} parent=0 // pred_region
    _
  $region9: #{discriminator_forward.5} parent=0 // pred_fallthru
    _
  %p12 = scmp.eq.s32.totalorder 0, 0
  // Predicated region
  $region10: #{discriminator_forward.5} parent=0 // pred_check
    %p13 = pneg %p12
  $region11: #{discriminator_forward.5} parent=0 // pred_check_branch
    %15 = sbr.rel (%p13) target = $region13
  $region12: #{discriminator_forward.5} parent=0 // pred_region
    %16 = vst [vmem:[#allocation2] sm:$0xff] 0.0
    %17 = vst [vmem:[#allocation2 + $0x8] sm:$0xff] 0.0
    %18 = vst [vmem:[#allocation2 + $0x10] sm:$0xff] 0.0
    %19 = vst [vmem:[#allocation2 + $0x18] sm:$0xff] 0.0
    %20 = vst [vmem:[#allocation2 + $0x20] sm:$0xff] 0.0
    %21 = vst [vmem:[#allocation2 + $0x28] sm:$0xff] 0.0
    %22 = vst [vmem:[#allocation2 + $0x30] sm:$0xff] 0.0
    %23 = vst [vmem:[#allocation2 + $0x38] sm:$0xff] 0.0
    %24 = vst [vmem:[#allocation2 + $0x40] sm:$0xff] 0.0
    %25 = vst [vmem:[#allocation2 + $0x48] sm:$0xff] 0.0
    %26 = vst [vmem:[#allocation2 + $0x50] sm:$0xff] 0.0
    %27 = vst [vmem:[#allocation2 + $0x58] sm:$0xff] 0.0
    %28 = vst [vmem:[#allocation2 + $0x60] sm:$0xff] 0.0
    %29 = vst [vmem:[#allocation2 + $0x68] sm:$0xff] 0.0
    %30 = vst [vmem:[#allocation2 + $0x70] sm:$0xff] 0.0
    %31 = vst [vmem:[#allocation2 + $0x78] sm:$0xff] 0.0
  $region13: #{discriminator_forward.5} parent=0 // pred_fallthru
    _
  %v32 = vld [vmem:[#allocation2] sm:$0xff]
  %v33 = vld [vmem:[#allocation2 + $0x8] sm:$0xff]
  %v34 = vld [vmem:[#allocation2 + $0x10] sm:$0xff]
  %v35 = vld [vmem:[#allocation2 + $0x18] sm:$0xff]
  %v36 = vld [vmem:[#allocation2 + $0x20] sm:$0xff]
  %v37 = vld [vmem:[#allocation2 + $0x28] sm:$0xff]
  %v38 = vld [vmem:[#allocation2 + $0x30] sm:$0xff]
  %v39 = vld [vmem:[#allocation2 + $0x38] sm:$0xff]
  %v40 = vld [vmem:[#allocation2 + $0x40] sm:$0xff]
  %v41 = vld [vmem:[#allocation2 + $0x48] sm:$0xff]
  %v42 = vld [vmem:[#allocation2 + $0x50] sm:$0xff]
  %v43 = vld [vmem:[#allocation2 + $0x58] sm:$0xff]
  %v44 = vld [vmem:[#allocation2 + $0x60] sm:$0xff]
  %v45 = vld [vmem:[#allocation2 + $0x68] sm:$0xff]
  %v46 = vld [vmem:[#allocation2 + $0x70] sm:$0xff]
  %v47 = vld [vmem:[#allocation2 + $0x78] sm:$0xff]
  %v48 = vld [vmem:[%s0] sm:$0xf]
  %v49 = vld [vmem:[%s0 + $0x4] sm:$0xf]
  %v50 = vld [vmem:[%s0 + $0x8] sm:$0xf]
  %v51 = vld [vmem:[%s0 + $0xc] sm:$0xf]
  %v52 = vld [vmem:[%s0 + $0x10] sm:$0xf]
  %v53 = vld [vmem:[%s0 + $0x14] sm:$0xf]
  %v54 = vld [vmem:[%s0 + $0x18] sm:$0xf]
  %v55 = vld [vmem:[%s0 + $0x1c] sm:$0xf]
  %v56 = vld [vmem:[%s0 + $0x20] sm:$0xf]
  %v57 = vld [vmem:[%s0 + $0x24] sm:$0xf]
  %v58 = vld [vmem:[%s0 + $0x28] sm:$0xf]
  %v59 = vld [vmem:[%s0 + $0x2c] sm:$0xf]
  %v60 = vld [vmem:[%s0 + $0x30] sm:$0xf]
  %v61 = vld [vmem:[%s0 + $0x34] sm:$0xf]
  %v62 = vld [vmem:[%s0 + $0x38] sm:$0xf]
  %v63 = vld [vmem:[%s0 + $0x3c] sm:$0xf]
  %v64 = vld [vmem:[%s1] sm:$0xf]
  %v65 = vld [vmem:[%s1 + $0x4] sm:$0xf]
  %v66 = vld [vmem:[%s1 + $0x8] sm:$0xf]
  %v67 = vld [vmem:[%s1 + $0xc] sm:$0xf]
  %v68 = vld [vmem:[%s1 + $0x10] sm:$0xf]
  %v69 = vld [vmem:[%s1 + $0x14] sm:$0xf]
  %v70 = vld [vmem:[%s1 + $0x18] sm:$0xf]
  %v71 = vld [vmem:[%s1 + $0x1c] sm:$0xf]
  %v72 = vld [vmem:[%s1 + $0x20] sm:$0xf]
  %v73 = vld [vmem:[%s1 + $0x24] sm:$0xf]
  %v74 = vld [vmem:[%s1 + $0x28] sm:$0xf]
  %v75 = vld [vmem:[%s1 + $0x2c] sm:$0xf]
  %v76 = vld [vmem:[%s1 + $0x30] sm:$0xf]
  %v77 = vld [vmem:[%s1 + $0x34] sm:$0xf]
  %v78 = vld [vmem:[%s1 + $0x38] sm:$0xf]
  %v79 = vld [vmem:[%s1 + $0x3c] sm:$0xf]
  %v96 = vunpack.c.l.b16 %v48
  %v97 = vunpack.c.l.b16 %v49
  %v98 = vunpack.c.l.b16 %v50
  %v99 = vunpack.c.l.b16 %v51
  %v100 = vunpack.c.l.b16 %v52
  %v101 = vunpack.c.l.b16 %v53
  %v102 = vunpack.c.l.b16 %v54
  %v103 = vunpack.c.l.b16 %v55
  %v104 = vunpack.c.l.b16 %v56
  %v105 = vunpack.c.l.b16 %v57
  %v106 = vunpack.c.l.b16 %v58
  %v107 = vunpack.c.l.b16 %v59
  %v108 = vunpack.c.l.b16 %v60
  %v109 = vunpack.c.l.b16 %v61
  %v110 = vunpack.c.l.b16 %v62
  %v111 = vunpack.c.l.b16 %v63
  %v112 = vpack.c.b16 %v97, %v96
  %v113 = vpack.c.b16 %v99, %v98
  %v114 = vpack.c.b16 %v101, %v100
  %v115 = vpack.c.b16 %v103, %v102
  %v116 = vpack.c.b16 %v105, %v104
  %v117 = vpack.c.b16 %v107, %v106
  %v118 = vpack.c.b16 %v109, %v108
  %v119 = vpack.c.b16 %v111, %v110
  %v144 = vunpack.c.l.b16 %v64
  %v145 = vunpack.c.l.b16 %v65
  %v146 = vunpack.c.l.b16 %v66
  %v147 = vunpack.c.l.b16 %v67
  %v148 = vunpack.c.l.b16 %v68
  %v149 = vunpack.c.l.b16 %v69
  %v150 = vunpack.c.l.b16 %v70
  %v151 = vunpack.c.l.b16 %v71
  %v152 = vunpack.c.l.b16 %v72
  %v153 = vunpack.c.l.b16 %v73
  %v154 = vunpack.c.l.b16 %v74
  %v155 = vunpack.c.l.b16 %v75
  %v156 = vunpack.c.l.b16 %v76
  %v157 = vunpack.c.l.b16 %v77
  %v158 = vunpack.c.l.b16 %v78
  %v159 = vunpack.c.l.b16 %v79
  %v160 = vpack.c.b16 %v145, %v144
  %v161 = vpack.c.b16 %v147, %v146
  %v162 = vpack.c.b16 %v149, %v148
  %v163 = vpack.c.b16 %v151, %v150
  %v164 = vpack.c.b16 %v153, %v152
  %v165 = vpack.c.b16 %v155, %v154
  %v166 = vpack.c.b16 %v157, %v156
  %v167 = vpack.c.b16 %v159, %v158
  %176 = vmatprep.subr.bf16.mxu0 0
  %177 = vmatpush1.bf16.msra.mxu0 %v167
  %178 = vmatprep.subr.bf16.mxu0 0
  %179 = vmatpush1.bf16.msra.mxu0 %v166
  %180 = vmatprep.subr.bf16.mxu0 0
  %181 = vmatpush1.bf16.msra.mxu0 %v165
  %182 = vmatprep.subr.bf16.mxu0 0
  %183 = vmatpush1.bf16.msra.mxu0 %v164
  %184 = vmatprep.subr.bf16.mxu0 0
  %185 = vmatpush1.bf16.msra.mxu0 %v163
  %186 = vmatprep.subr.bf16.mxu0 0
  %187 = vmatpush1.bf16.msra.mxu0 %v162
  %188 = vmatprep.subr.bf16.mxu0 0
  %189 = vmatpush1.bf16.msra.mxu0 %v161
  %190 = vmatprep.subr.bf16.mxu0 0
  %191 = vmatpush1.bf16.msra.mxu0 %v160
  %192 = vmatprep.subr.bf16.mxu0 0
  %193 = vmatpush2.bf16.msra.mxu0 0
  %194 = vmatprep.subr.bf16.mxu0 0
  %195 = vmatpush2.bf16.msra.mxu0 0
  %196 = vmatprep.subr.bf16.mxu0 0
  %197 = vmatpush2.bf16.msra.mxu0 0
  %198 = vmatprep.subr.bf16.mxu0 0
  %199 = vmatpush2.bf16.msra.mxu0 0
  %200 = vmatprep.subr.bf16.mxu0 0
  %201 = vmatpush2.bf16.msra.mxu0 0
  %202 = vmatprep.subr.bf16.mxu0 0
  %203 = vmatpush2.bf16.msra.mxu0 0
  %204 = vmatprep.subr.bf16.mxu0 0
  %205 = vmatpush2.bf16.msra.mxu0 0
  %206 = vmatprep.subr.bf16.mxu0 0
  %207 = vmatpush2.bf16.msra.mxu0 0
  %208 = vmatprep.mubr.bf16.mxu0 0
  %209 = vmatmul.mubr.bf16.gmra.mxu0 %v112
  %v210 = vpop.f32.mrf.mxu0
  %v211 = vadd.f32 0.0, %v210
  %v212 = vpop.f32.mrf.mxu0
  %v213 = vpop.f32.mrf.mxu0
  %v214 = vadd.f32 0.0, %v213
  %v215 = vpop.f32.mrf.mxu0
  %216 = vmatprep.mubr.bf16.mxu0 0
  %217 = vmatmul.mubr.bf16.gmra.mxu0 %v113
  %v218 = vpop.f32.mrf.mxu0
  %v219 = vadd.f32 0.0, %v218
  %v220 = vpop.f32.mrf.mxu0
  %v221 = vpop.f32.mrf.mxu0
  %v222 = vadd.f32 0.0, %v221
  %v223 = vpop.f32.mrf.mxu0
  %224 = vmatprep.mubr.bf16.mxu0 0
  %225 = vmatmul.mubr.bf16.gmra.mxu0 %v114
  %v226 = vpop.f32.mrf.mxu0
  %v227 = vadd.f32 0.0, %v226
  %v228 = vpop.f32.mrf.mxu0
  %v229 = vpop.f32.mrf.mxu0
  %v230 = vadd.f32 0.0, %v229
  %v231 = vpop.f32.mrf.mxu0
  %232 = vmatprep.mubr.bf16.mxu0 0
  %233 = vmatmul.mubr.bf16.gmra.mxu0 %v115
  %v234 = vpop.f32.mrf.mxu0
  %v235 = vadd.f32 0.0, %v234
  %v236 = vpop.f32.mrf.mxu0
  %v237 = vpop.f32.mrf.mxu0
  %v238 = vadd.f32 0.0, %v237
  %v239 = vpop.f32.mrf.mxu0
  %240 = vmatprep.mubr.bf16.mxu0 0
  %241 = vmatmul.mubr.bf16.gmra.mxu0 %v116
  %v242 = vpop.f32.mrf.mxu0
  %v243 = vadd.f32 0.0, %v242
  %v244 = vpop.f32.mrf.mxu0
  %v245 = vpop.f32.mrf.mxu0
  %v246 = vadd.f32 0.0, %v245
  %v247 = vpop.f32.mrf.mxu0
  %248 = vmatprep.mubr.bf16.mxu0 0
  %249 = vmatmul.mubr.bf16.gmra.mxu0 %v117
  %v250 = vpop.f32.mrf.mxu0
  %v251 = vadd.f32 0.0, %v250
  %v252 = vpop.f32.mrf.mxu0
  %v253 = vpop.f32.mrf.mxu0
  %v254 = vadd.f32 0.0, %v253
  %v255 = vpop.f32.mrf.mxu0
  %256 = vmatprep.mubr.bf16.mxu0 0
  %257 = vmatmul.mubr.bf16.gmra.mxu0 %v118
  %v258 = vpop.f32.mrf.mxu0
  %v259 = vadd.f32 0.0, %v258
  %v260 = vpop.f32.mrf.mxu0
  %v261 = vpop.f32.mrf.mxu0
  %v262 = vadd.f32 0.0, %v261
  %v263 = vpop.f32.mrf.mxu0
  %264 = vmatprep.mubr.bf16.mxu0 0
  %265 = vmatmul.mubr.bf16.gmra.mxu0 %v119
  %v266 = vpop.f32.mrf.mxu0
  %v267 = vadd.f32 0.0, %v266
  %v268 = vpop.f32.mrf.mxu0
  %v269 = vpop.f32.mrf.mxu0
  %v270 = vadd.f32 0.0, %v269
  %v271 = vpop.f32.mrf.mxu0
  %272 = vdwg.mxu0
  %v273 = vadd.f32 %v32, %v211
  %v274 = vadd.f32 %v33, %v214
  %v275 = vadd.f32 %v34, %v219
  %v276 = vadd.f32 %v35, %v222
  %v277 = vadd.f32 %v36, %v227
  %v278 = vadd.f32 %v37, %v230
  %v279 = vadd.f32 %v38, %v235
  %v280 = vadd.f32 %v39, %v238
  %v281 = vadd.f32 %v40, %v243
  %v282 = vadd.f32 %v41, %v246
  %v283 = vadd.f32 %v42, %v251
  %v284 = vadd.f32 %v43, %v254
  %v285 = vadd.f32 %v44, %v259
  %v286 = vadd.f32 %v45, %v262
  %v287 = vadd.f32 %v46, %v267
  %v288 = vadd.f32 %v47, %v270
  %289 = vst [vmem:[#allocation2] sm:$0xff] %v273
  %290 = vst [vmem:[#allocation2 + $0x8] sm:$0xff] %v274
  %291 = vst [vmem:[#allocation2 + $0x10] sm:$0xff] %v275
  %292 = vst [vmem:[#allocation2 + $0x18] sm:$0xff] %v276
  %293 = vst [vmem:[#allocation2 + $0x20] sm:$0xff] %v277
  %294 = vst [vmem:[#allocation2 + $0x28] sm:$0xff] %v278
  %295 = vst [vmem:[#allocation2 + $0x30] sm:$0xff] %v279
  %296 = vst [vmem:[#allocation2 + $0x38] sm:$0xff] %v280
  %297 = vst [vmem:[#allocation2 + $0x40] sm:$0xff] %v281
  %298 = vst [vmem:[#allocation2 + $0x48] sm:$0xff] %v282
  %299 = vst [vmem:[#allocation2 + $0x50] sm:$0xff] %v283
  %300 = vst [vmem:[#allocation2 + $0x58] sm:$0xff] %v284
  %301 = vst [vmem:[#allocation2 + $0x60] sm:$0xff] %v285
  %302 = vst [vmem:[#allocation2 + $0x68] sm:$0xff] %v286
  %303 = vst [vmem:[#allocation2 + $0x70] sm:$0xff] %v287
  %304 = vst [vmem:[#allocation2 + $0x78] sm:$0xff] %v288
  // Predicated region
  $region14: #{discriminator_forward.5} parent=0 // pred_check
    %p305 = pneg %p12
  $region15: #{discriminator_forward.5} parent=0 // pred_check_branch
    %307 = sbr.rel (%p305) target = $region17
  $region16: #{discriminator_forward.5} parent=0 // pred_region
    %v308 = vld [vmem:[#allocation2] sm:$0xff]
    %v309 = vld [vmem:[#allocation2 + $0x8] sm:$0xff]
    %v310 = vld [vmem:[#allocation2 + $0x10] sm:$0xff]
    %v311 = vld [vmem:[#allocation2 + $0x18] sm:$0xff]
    %v312 = vld [vmem:[#allocation2 + $0x20] sm:$0xff]
    %v313 = vld [vmem:[#allocation2 + $0x28] sm:$0xff]
    %v314 = vld [vmem:[#allocation2 + $0x30] sm:$0xff]
    %v315 = vld [vmem:[#allocation2 + $0x38] sm:$0xff]
    %v316 = vld [vmem:[#allocation2 + $0x40] sm:$0xff]
    %v317 = vld [vmem:[#allocation2 + $0x48] sm:$0xff]
    %v318 = vld [vmem:[#allocation2 + $0x50] sm:$0xff]
    %v319 = vld [vmem:[#allocation2 + $0x58] sm:$0xff]
    %v320 = vld [vmem:[#allocation2 + $0x60] sm:$0xff]
    %v321 = vld [vmem:[#allocation2 + $0x68] sm:$0xff]
    %v322 = vld [vmem:[#allocation2 + $0x70] sm:$0xff]
    %v323 = vld [vmem:[#allocation2 + $0x78] sm:$0xff]
    %v324 = vmax.f32 %v308, 0.0
    %v325 = vmax.f32 %v309, 0.0
    %v326 = vmax.f32 %v310, 0.0
    %v327 = vmax.f32 %v311, 0.0
    %v328 = vmax.f32 %v312, 0.0
    %v329 = vmax.f32 %v313, 0.0
    %v330 = vmax.f32 %v314, 0.0
    %v331 = vmax.f32 %v315, 0.0
    %v332 = vmax.f32 %v316, 0.0
    %v333 = vmax.f32 %v317, 0.0
    %v334 = vmax.f32 %v318, 0.0
    %v335 = vmax.f32 %v319, 0.0
    %v336 = vmax.f32 %v320, 0.0
    %v337 = vmax.f32 %v321, 0.0
    %v338 = vmax.f32 %v322, 0.0
    %v339 = vmax.f32 %v323, 0.0
    %v340 = vpack.c.bf16 %v325, %v324
    %v341 = vpack.c.bf16 %v327, %v326
    %v342 = vpack.c.bf16 %v329, %v328
    %v343 = vpack.c.bf16 %v331, %v330
    %v344 = vpack.c.bf16 %v333, %v332
    %v345 = vpack.c.bf16 %v335, %v334
    %v346 = vpack.c.bf16 %v337, %v336
    %v347 = vpack.c.bf16 %v339, %v338
    %v356 = vunpack.c.l.b16 %v340
    %v357 = vunpack.c.h.b16 %v340
    %v358 = vunpack.c.l.b16 %v341
    %v359 = vunpack.c.h.b16 %v341
    %v360 = vunpack.c.l.b16 %v342
    %v361 = vunpack.c.h.b16 %v342
    %v362 = vunpack.c.l.b16 %v343
    %v363 = vunpack.c.h.b16 %v343
    %v364 = vunpack.c.l.b16 %v344
    %v365 = vunpack.c.h.b16 %v344
    %v366 = vunpack.c.l.b16 %v345
    %v367 = vunpack.c.h.b16 %v345
    %v368 = vunpack.c.l.b16 %v346
    %v369 = vunpack.c.h.b16 %v346
    %v370 = vunpack.c.l.b16 %v347
    %v371 = vunpack.c.h.b16 %v347
    %v372 = vpack.c.b16 %v356, %v356
    %v373 = vpack.c.b16 %v357, %v357
    %v374 = vpack.c.b16 %v358, %v358
    %v375 = vpack.c.b16 %v359, %v359
    %v376 = vpack.c.b16 %v360, %v360
    %v377 = vpack.c.b16 %v361, %v361
    %v378 = vpack.c.b16 %v362, %v362
    %v379 = vpack.c.b16 %v363, %v363
    %v380 = vpack.c.b16 %v364, %v364
    %v381 = vpack.c.b16 %v365, %v365
    %v382 = vpack.c.b16 %v366, %v366
    %v383 = vpack.c.b16 %v367, %v367
    %v384 = vpack.c.b16 %v368, %v368
    %v385 = vpack.c.b16 %v369, %v369
    %v386 = vpack.c.b16 %v370, %v370
    %v387 = vpack.c.b16 %v371, %v371
    %404 = vst [vmem:[%s2] sm:$0xf] %v372
    %405 = vst [vmem:[%s2 + $0x4] sm:$0xf] %v373
    %406 = vst [vmem:[%s2 + $0x8] sm:$0xf] %v374
    %407 = vst [vmem:[%s2 + $0xc] sm:$0xf] %v375
    %408 = vst [vmem:[%s2 + $0x10] sm:$0xf] %v376
    %409 = vst [vmem:[%s2 + $0x14] sm:$0xf] %v377
    %410 = vst [vmem:[%s2 + $0x18] sm:$0xf] %v378
    %411 = vst [vmem:[%s2 + $0x1c] sm:$0xf] %v379
    %412 = vst [vmem:[%s2 + $0x20] sm:$0xf] %v380
    %413 = vst [vmem:[%s2 + $0x24] sm:$0xf] %v381
    %414 = vst [vmem:[%s2 + $0x28] sm:$0xf] %v382
    %415 = vst [vmem:[%s2 + $0x2c] sm:$0xf] %v383
    %416 = vst [vmem:[%s2 + $0x30] sm:$0xf] %v384
    %417 = vst [vmem:[%s2 + $0x34] sm:$0xf] %v385
    %418 = vst [vmem:[%s2 + $0x38] sm:$0xf] %v386
    %419 = vst [vmem:[%s2 + $0x3c] sm:$0xf] %v387
  $region17: #{discriminator_forward.5} parent=0 // pred_fallthru
    _
  // Predicated region
  $region18: #{discriminator_forward.5} parent=0 // pred_check
    _
  $region19: #{discriminator_forward.5} parent=0 // pred_check_branch
    %421 = sbr.rel (0) target = $region21
  $region20: #{discriminator_forward.5} parent=0 // pred_region
    _
  $region21: #{discriminator_forward.5} parent=0 // pred_fallthru
    _
  // Predicated region
  $region22: #{discriminator_forward.5} parent=0 // pred_check
    _
  $region23: #{discriminator_forward.5} parent=0 // pred_check_branch
    %423 = sbr.rel (0) target = $region25
  $region24: #{discriminator_forward.5} parent=0 // pred_region
    _
  $region25: #{discriminator_forward.5} parent=0 // pred_fallthru
    _

// kernel: discriminator_forward.7
$region0: #{discriminator_forward.7}
  #allocation0 [shape = 'u32[]', space=smem, size = 0x4, offset = 0x4, fixed_abs, tag = 'smem constant byte address 0x4 - core index']
  #allocation1 [shape = 'u32[144,128]{1,0:T(1,128)}', space=vmem, size = 0x12000, scoped, tag = 'internal scratch']
  %s0 = inlined_call_operand.vmem [shape: bf16[32,128], index: 0, kind: input, shape index: {}]
  %s1 = inlined_call_operand.vmem [shape: f32[1,128], index: 1, kind: input, shape index: {}]
  %s2 = inlined_call_operand.vmem [shape: f32[1,128], index: 2, kind: input, shape index: {}]
  %s3 = inlined_call_operand.vmem [shape: bf16[32,128], index: 3, kind: output, shape index: {}]
  %s4 = sld [smem:[#allocation0]]
  $region22: #{discriminator_forward.7} parent=0
    _
  %s6 = ssub.s32 1, %s4
  %s7 = scalar_select 0, %s6, %s4
  // Predicated region
  $region2: #{discriminator_forward.7} parent=0 // pred_check
    _
  $region3: #{discriminator_forward.7} parent=0 // pred_check_branch
    %9 = sbr.rel (0) target = $region5
  $region4: #{discriminator_forward.7} parent=0 // pred_region
    _
  $region5: #{discriminator_forward.7} parent=0 // pred_fallthru
    _
  // Predicated region
  $region6: #{discriminator_forward.7} parent=0 // pred_check
    _
  $region7: #{discriminator_forward.7} parent=0 // pred_check_branch
    %11 = sbr.rel (0) target = $region9
  $region8: #{discriminator_forward.7} parent=0 // pred_region
    _
  $region9: #{discriminator_forward.7} parent=0 // pred_fallthru
    _
  // Predicated region
  $region10: #{discriminator_forward.7} parent=0 // pred_check
    _
  $region11: #{discriminator_forward.7} parent=0 // pred_check_branch
    %13 = sbr.rel (0) target = $region13
  $region12: #{discriminator_forward.7} parent=0 // pred_region
    _
  $region13: #{discriminator_forward.7} parent=0 // pred_fallthru
    _
  %v14 = vld [vmem:[%s0] sm:$0xf]
  %v15 = vld [vmem:[%s0 + $0x4] sm:$0xf]
  %v16 = vld [vmem:[%s0 + $0x8] sm:$0xf]
  %v17 = vld [vmem:[%s0 + $0xc] sm:$0xf]
  %v18 = vunpack.c.l.bf16 %v14
  %v19 = vunpack.c.l.bf16 %v15
  %v20 = vunpack.c.l.bf16 %v16
  %v21 = vunpack.c.l.bf16 %v17
  %v22 = vld [vmem:[%s1] sm:$0x1]
  %v24 = vlaneseq
  %v25 = vshrl.u32 %v24, 7
  %v26 = vsub.s32 0, %v25
  %v27 = vrot.slane %v22, %v26
  %v29 = vmul.f32 %v18, %v27
  %v30 = vmul.f32 %v19, %v27
  %v31 = vmul.f32 %v20, %v27
  %v32 = vmul.f32 %v21, %v27
  %v33 = vld [vmem:[%s2] sm:$0x1]
  %v35 = vlaneseq
  %v36 = vshrl.u32 %v35, 7
  %v37 = vsub.s32 0, %v36
  %v38 = vrot.slane %v33, %v37
  %v40 = vadd.f32 %v29, %v38
  %v41 = vadd.f32 %v30, %v38
  %v42 = vadd.f32 %v31, %v38
  %v43 = vadd.f32 %v32, %v38
  %v44 = vmax.f32 %v40, 0.0
  %v45 = vmax.f32 %v41, 0.0
  %v46 = vmax.f32 %v42, 0.0
  %v47 = vmax.f32 %v43, 0.0
  %v48 = vpack.c.bf16 %v45, %v44
  %v49 = vpack.c.bf16 %v47, %v46
  %v52 = vunpack.c.l.b16 %v48
  %v53 = vunpack.c.h.b16 %v48
  %v54 = vunpack.c.l.b16 %v49
  %v55 = vunpack.c.h.b16 %v49
  %v56 = vpack.c.b16 %v52, %v52
  %v57 = vpack.c.b16 %v53, %v53
  %v58 = vpack.c.b16 %v54, %v54
  %v59 = vpack.c.b16 %v55, %v55
  %64 = vst [vmem:[%s3] sm:$0xf] %v56
  %65 = vst [vmem:[%s3 + $0x4] sm:$0xf] %v57
  %66 = vst [vmem:[%s3 + $0x8] sm:$0xf] %v58
  %67 = vst [vmem:[%s3 + $0xc] sm:$0xf] %v59
  // Predicated region
  $region14: #{discriminator_forward.7} parent=0 // pred_check
    _
  $region15: #{discriminator_forward.7} parent=0 // pred_check_branch
    %69 = sbr.rel (0) target = $region17
  $region16: #{discriminator_forward.7} parent=0 // pred_region
    _
  $region17: #{discriminator_forward.7} parent=0 // pred_fallthru
    _
  // Predicated region
  $region18: #{discriminator_forward.7} parent=0 // pred_check
    _
  $region19: #{discriminator_forward.7} parent=0 // pred_check_branch
    %71 = sbr.rel (0) target = $region21
  $region20: #{discriminator_forward.7} parent=0 // pred_region
    _
  $region21: #{discriminator_forward.7} parent=0 // pred_fallthru
    _

// kernel: discriminator_forward.6
$region0: #{discriminator_forward.6}
  #allocation0 [shape = 'u32[]', space=smem, size = 0x4, offset = 0x4, fixed_abs, tag = 'smem constant byte address 0x4 - core index']
  #allocation1 [shape = 'u32[144,128]{1,0:T(1,128)}', space=vmem, size = 0x12000, scoped, tag = 'internal scratch']
  #allocation2 [shape = 'f32[32,128]{1,0:T(8,128)}', space=vmem, size = 0x4000, scoped, tag = 'scratch operand']
  %s0 = inlined_call_operand.vmem [shape: bf16[32,2048], index: 0, kind: input, shape index: {}]
  %s1 = inlined_call_operand.vmem [shape: bf16[2048,128], index: 1, kind: input, shape index: {}]
  %s2 = inlined_call_operand.vmem [shape: bf16[32,128], index: 2, kind: output, shape index: {0}]
  %s3 = inlined_call_operand.vmem [shape: f32[8,128], index: 3, kind: output, shape index: {1}]
  %4 = xla_tuple %s2, %s3
  %s5 = sld [smem:[#allocation0]]
  $region80: #{discriminator_forward.6} parent=0
    _
  %s7 = ssub.s32 1, %s5
  %s8 = scalar_select 0, %s7, %s5
  $region1: #{discriminator_forward.6} parent=0
    #allocation3 [shape = 'u8[65536]{0}', space=vmem, size = 0x10000, scoped, tag = 'input window, operand 0']
    loop: start=0, step=1, limit=6
    $region2: #{discriminator_forward.6} parent=1 // loop_pre_header
      _
    $region3: #{discriminator_forward.6} parent=1 // loop_header
      %s10 = sphi 0, %s14
      %p11 = scmp.ge.s32.totalorder %s10, 6
      %s17 = sphi 0, %s36
      %s18 = sphi 0, %s32
      %s19 = sphi 0, %s28
      %s20 = sphi 0, %s17
      %s21 = sphi 0, %s18
      %s22 = sphi 0, %s19
      %s23 = sphi 0, %s20
      %s24 = sphi 0, %s21
      %s25 = sphi 0, %s22
      %s41 = sphi 0, %s43
      %s44 = sphi 0, %s41
      %s45 = sphi 0, %s44
      %s61 = sphi 0, %s45
      %s69 = sphi 0, %s71
      %s72 = sphi 0, %s69
      %s73 = sphi 0, %s72
      %s89 = sphi 0, %s73
      %s97 = sphi 0, %s99
      %s100 = sphi 0, %s97
      %s101 = sphi 0, %s100
      %s117 = sphi 0, %s101
      %s125 = sphi 0, %s127
      %s128 = sphi 0, %s125
      %s129 = sphi 0, %s128
      %s145 = sphi 0, %s129
    $region4: #{discriminator_forward.6} parent=1 // loop_header_branch
      %13 = sbr.rel (%p11) target = $region8
    $region5: #{discriminator_forward.6} parent=1 // loop_body
      %s15 = ssub.s32 %s10, 1
      %s16 = ssub.s32 %s10, 2
      %s26 = sadd.s32 1, %s19
      %p27 = scmp.ge.s32.totalorder %s26, 4
      %s28 = scalar_select %p27, 0, %s26
      %s29 = sadd.s32 1, %s18
      %s30 = scalar_select %p27, %s29, %s18
      %p31 = scmp.ge.s32.totalorder %s30, 1
      %s32 = scalar_select %p31, 0, %s30
      %s33 = sadd.s32 1, %s17
      %s34 = scalar_select %p31, %s33, %s17
      %p35 = scmp.ge.s32.totalorder %s34, 1
      %s36 = scalar_select %p35, 0, %s34
      %s37 = ssub.s32 %s17, %s36
      %s38 = ssub.s32 %s19, %s28
      %s39 = sor.u32 %s37, %s38
      %p40 = scmp.eq.s32.totalorder %s39, 0
      %s42 = sadd.s32 %s41, 1
      %s43 = scalar_select %p40, %s41, %s42
      %p46 = pneg %p40
      %p47 = scmp.eq.s32.totalorder %s10, 3
      %p48 = por %p46, %p47
      %p49 = scmp.ne.s32.totalorder %s41, %s44
      %p50 = scmp.eq.s32.totalorder %s10, 0
      %p51 = por %p49, %p50
      %p52 = scmp.ne.s32.totalorder %s41, %s44
      %p53 = scmp.eq.s32.totalorder %s15, 3
      %p54 = por %p52, %p53
      %p55 = scmp.ne.s32.totalorder %s44, %s45
      %p56 = scmp.eq.s32.totalorder %s15, 0
      %p57 = por %p55, %p56
      %p58 = scmp.ne.s32.totalorder %s44, %s45
      %p59 = scmp.eq.s32.totalorder %s16, 3
      %p60 = por %p58, %p59
      %p62 = scmp.ne.s32.totalorder %s45, %s61
      %p63 = scmp.eq.s32.totalorder %s16, 0
      %p64 = por %p62, %p63
      %s65 = ssub.s32 %s19, %s28
      %s66 = ssub.s32 %s18, %s32
      %s67 = sor.u32 %s65, %s66
      %p68 = scmp.eq.s32.totalorder %s67, 0
      %s70 = sadd.s32 %s69, 1
      %s71 = scalar_select %p68, %s69, %s70
      %p74 = pneg %p68
      %p75 = scmp.eq.s32.totalorder %s10, 3
      %p76 = por %p74, %p75
      %p77 = scmp.ne.s32.totalorder %s69, %s72
      %p78 = scmp.eq.s32.totalorder %s10, 0
      %p79 = por %p77, %p78
      %p80 = scmp.ne.s32.totalorder %s69, %s72
      %p81 = scmp.eq.s32.totalorder %s15, 3
      %p82 = por %p80, %p81
      %p83 = scmp.ne.s32.totalorder %s72, %s73
      %p84 = scmp.eq.s32.totalorder %s15, 0
      %p85 = por %p83, %p84
      %p86 = scmp.ne.s32.totalorder %s72, %s73
      %p87 = scmp.eq.s32.totalorder %s16, 3
      %p88 = por %p86, %p87
      %p90 = scmp.ne.s32.totalorder %s73, %s89
      %p91 = scmp.eq.s32.totalorder %s16, 0
      %p92 = por %p90, %p91
      %s93 = ssub.s32 %s17, %s36
      %s94 = ssub.s32 %s18, %s32
      %s95 = sor.u32 %s93, %s94
      %p96 = scmp.eq.s32.totalorder %s95, 0
      %s98 = sadd.s32 %s97, 1
      %s99 = scalar_select %p96, %s97, %s98
      %p102 = pneg %p96
      %p103 = scmp.eq.s32.totalorder %s10, 3
      %p104 = por %p102, %p103
      %p105 = scmp.ne.s32.totalorder %s97, %s100
      %p106 = scmp.eq.s32.totalorder %s10, 0
      %p107 = por %p105, %p106
      %p108 = scmp.ne.s32.totalorder %s97, %s100
      %p109 = scmp.eq.s32.totalorder %s15, 3
      %p110 = por %p108, %p109
      %p111 = scmp.ne.s32.totalorder %s100, %s101
      %p112 = scmp.eq.s32.totalorder %s15, 0
      %p113 = por %p111, %p112
      %p114 = scmp.ne.s32.totalorder %s100, %s101
      %p115 = scmp.eq.s32.totalorder %s16, 3
      %p116 = por %p114, %p115
      %p118 = scmp.ne.s32.totalorder %s101, %s117
      %p119 = scmp.eq.s32.totalorder %s16, 0
      %p120 = por %p118, %p119
      %s121 = ssub.s32 %s17, %s36
      %s122 = ssub.s32 %s18, %s32
      %s123 = sor.u32 %s121, %s122
      %p124 = scmp.eq.s32.totalorder %s123, 0
      %s126 = sadd.s32 %s125, 1
      %s127 = scalar_select %p124, %s125, %s126
      %p130 = pneg %p124
      %p131 = scmp.eq.s32.totalorder %s10, 3
      %p132 = por %p130, %p131
      %p133 = scmp.ne.s32.totalorder %s125, %s128
      %p134 = scmp.eq.s32.totalorder %s10, 0
      %p135 = por %p133, %p134
      %p136 = scmp.ne.s32.totalorder %s125, %s128
      %p137 = scmp.eq.s32.totalorder %s15, 3
      %p138 = por %p136, %p137
      %p139 = scmp.ne.s32.totalorder %s128, %s129
      %p140 = scmp.eq.s32.totalorder %s15, 0
      %p141 = por %p139, %p140
      %p142 = scmp.ne.s32.totalorder %s128, %s129
      %p143 = scmp.eq.s32.totalorder %s16, 3
      %p144 = por %p142, %p143
      %p146 = scmp.ne.s32.totalorder %s129, %s145
      %p147 = scmp.eq.s32.totalorder %s16, 0
      %p148 = por %p146, %p147
      %p149 = scmp.le.s32.totalorder 1, %s10
      %p150 = scmp.lt.s32.totalorder %s10, 5
      %p151 = pnand %p149, %p150
      %p152 = pneg %p151
      // Predicated region
      $region9: #{discriminator_forward.6} parent=5 // pred_check
        _
      $region10: #{discriminator_forward.6} parent=5 // pred_check_branch
        %154 = sbr.rel (%p151) target = $region12
      $region11: #{discriminator_forward.6} parent=5 // pred_region
        %s155 = ssub.s32 %s10, 1
      $region12: #{discriminator_forward.6} parent=5 // pred_fallthru
        _
      %p156 = scmp.lt.s32.totalorder %s10, 4
      // Predicated region
      $region13: #{discriminator_forward.6} parent=5 // pred_check
        %p157 = pneg %p156
      $region14: #{discriminator_forward.6} parent=5 // pred_check_branch
        %159 = sbr.rel (%p157) target = $region16
      $region15: #{discriminator_forward.6} parent=5 // pred_region
        // Predicated region
        $region17: #{discriminator_forward.6} parent=15 // pred_check
          %p160 = pneg %p51
        $region18: #{discriminator_forward.6} parent=15 // pred_check_branch
          %162 = sbr.rel (%p160) target = $region20
        $region19: #{discriminator_forward.6} parent=15 // pred_region
          %s163 = sand.u32 %s41, 1
          %s164 = sand.u32 %s41, 1
          %s165 = smul.addr %s164, 64
          %s166 = scalar_lea.vmem [#allocation3], %s165
          %s167 = smul.u32 4, %s17
          %s168 = smul.u32 4, %s19
          %s169 = smul.addr %s167, 16
          %s170 = sadd.s32 %s168, %s169
          %s171 = smul.addr %s170, 4
          %s172 = scalar_lea.vmem %s0, %s171
          // Predicated region
          $region21: #{discriminator_forward.6} parent=19 // pred_check
            _
          $region22: #{discriminator_forward.6} parent=19 // pred_check_branch
            %174 = sbr.rel (0) target = $region24
          $region23: #{discriminator_forward.6} parent=19 // pred_region
            // Predicated region
            $region25: #{discriminator_forward.6} parent=23 // pred_check
              _
            $region26: #{discriminator_forward.6} parent=23 // pred_check_branch
              %176 = sbr.rel (0) target = $region28
            $region27: #{discriminator_forward.6} parent=23 // pred_region
              loop: start=0, step=1, limit=1
              $region29: #{discriminator_forward.6} parent=27 // loop_pre_header
                _
              $region30: #{discriminator_forward.6} parent=27 // loop_header
                %s178 = sphi 0, %s182
                %p179 = scmp.ge.s32.totalorder %s178, 1
                %s183 = sphi %s172, %s172
                %s184 = sphi %s166, %s166
              $region31: #{discriminator_forward.6} parent=27 // loop_header_branch
                %181 = sbr.rel (%p179) target = $region35
              $region32: #{discriminator_forward.6} parent=27 // loop_body
                %v185 = vld [vmem:[%s183] sm:$0xff]
                %186 = vst [vmem:[%s184] sm:$0xff] %v185
                %v187 = vld [vmem:[%s183 + $0x8] sm:$0xff]
                %188 = vst [vmem:[%s184 + $0x8] sm:$0xff] %v187
                %v189 = vld [vmem:[%s183 + $0x40] sm:$0xff]
                %190 = vst [vmem:[%s184 + $0x10] sm:$0xff] %v189
                %v191 = vld [vmem:[%s183 + $0x48] sm:$0xff]
                %192 = vst [vmem:[%s184 + $0x18] sm:$0xff] %v191
                %v193 = vld [vmem:[%s183 + $0x80] sm:$0xff]
                %194 = vst [vmem:[%s184 + $0x20] sm:$0xff] %v193
                %v195 = vld [vmem:[%s183 + $0x88] sm:$0xff]
                %196 = vst [vmem:[%s184 + $0x28] sm:$0xff] %v195
                %v197 = vld [vmem:[%s183 + $0xc0] sm:$0xff]
                %198 = vst [vmem:[%s184 + $0x30] sm:$0xff] %v197
                %v199 = vld [vmem:[%s183 + $0xc8] sm:$0xff]
                %200 = vst [vmem:[%s184 + $0x38] sm:$0xff] %v199
              $region33: #{discriminator_forward.6} parent=27 // loop_footer
                %s182 = sadd.s32 1, %s178
              $region34: #{discriminator_forward.6} parent=27 // loop_footer_branch
                %177 = sbr.rel target = $region30
              $region35: #{discriminator_forward.6} parent=27 // loop_exit
                _
            $region28: #{discriminator_forward.6} parent=23 // pred_fallthru
              _
            // Predicated region
            $region36: #{discriminator_forward.6} parent=23 // pred_check
              _
            $region37: #{discriminator_forward.6} parent=23 // pred_check_branch
              %202 = sbr.rel target = $region39
            $region38: #{discriminator_forward.6} parent=23 // pred_region
              _
            $region39: #{discriminator_forward.6} parent=23 // pred_fallthru
              _
          $region24: #{discriminator_forward.6} parent=19 // pred_fallthru
            _
          %203 = vnop
        $region20: #{discriminator_forward.6} parent=15 // pred_fallthru
          _
        // Predicated region
        $region40: #{discriminator_forward.6} parent=15 // pred_check
          %p204 = pneg %p79
        $region41: #{discriminator_forward.6} parent=15 // pred_check_branch
          %206 = sbr.rel (%p204) target = $region43
        $region42: #{discriminator_forward.6} parent=15 // pred_region
          %s207 = smul.u32 64, %s19
          %p208 = scmp.lt.s32.totalorder %s207, 255
          %s209 = scalar_select %p208, %s207, 255
          %p210 = scmp.lt.s32.totalorder %s18, 0
          %s211 = scalar_select %p210, %s18, 0
          %s212 = sadd.s32 %s211, %s209
          %s213 = smul.addr %s212, 4
          %s214 = scalar_lea.vmem %s1, %s213
          %s215 = smul.u32 64, %s19
        $region43: #{discriminator_forward.6} parent=15 // pred_fallthru
          _
      $region16: #{discriminator_forward.6} parent=5 // pred_fallthru
        _
      %p216 = scmp.le.s32.totalorder 1, %s10
      %p217 = scmp.lt.s32.totalorder %s10, 5
      %p218 = pnand %p216, %p217
      %p219 = pneg %p218
      // Predicated region
      $region44: #{discriminator_forward.6} parent=5 // pred_check
        _
      $region45: #{discriminator_forward.6} parent=5 // pred_check_branch
        %221 = sbr.rel (%p218) target = $region47
      $region46: #{discriminator_forward.6} parent=5 // pred_region
        %s222 = ssub.s32 %s10, 1
        %s223 = sand.u32 %s44, 1
        %s224 = sand.u32 %s44, 1
        %s225 = smul.addr %s224, 64
        %s226 = scalar_lea.vmem [#allocation3], %s225
        // Predicated region
        $region48: #{discriminator_forward.6} parent=46 // pred_check
          %p227 = pneg %p57
        $region49: #{discriminator_forward.6} parent=46 // pred_check_branch
          %229 = sbr.rel (%p227) target = $region51
        $region50: #{discriminator_forward.6} parent=46 // pred_region
          _
        $region51: #{discriminator_forward.6} parent=46 // pred_fallthru
          _
        %s230 = sand.u32 %s44, 1
        %s231 = sand.u32 %s44, 1
        %s232 = smul.addr %s231, 64
        %s233 = scalar_lea.vmem [#allocation3], %s232
        %p234 = pneg %p57
        %p235 = pneg %p54
        %s236 = smul.u32 64, %s22
        %p237 = scmp.lt.s32.totalorder %s236, 255
        %s238 = scalar_select %p237, %s236, 255
        %p239 = scmp.lt.s32.totalorder %s21, 0
        %s240 = scalar_select %p239, %s21, 0
        %s241 = sadd.s32 %s240, %s238
        %s242 = smul.addr %s241, 4
        %s243 = scalar_lea.vmem %s1, %s242
        %p244 = pneg %p85
        %p245 = pneg %p82
        %p246 = pneg %p113
        %p247 = pneg %p110
        %s248 = smul.u32 4, %s20
        %p249 = scmp.lt.s32.totalorder %s248, 3
        %s250 = scalar_select %p249, %s248, 3
        %p251 = scmp.lt.s32.totalorder %s21, 0
        %s252 = scalar_select %p251, %s21, 0
        %s253 = sadd.s32 %s252, %s250
        %s254 = smul.addr %s253, 4
        %s255 = scalar_lea.vmem %s2, %s254
        %p256 = pneg %p141
        %p257 = pneg %p138
        %p258 = scmp.lt.s32.totalorder %s20, 0
        %s259 = scalar_select %p258, %s20, 0
        %p260 = scmp.lt.s32.totalorder %s21, 0
        %s261 = scalar_select %p260, %s21, 0
        %s262 = sadd.s32 %s261, %s259
        %s263 = smul.addr %s262, 8
        %s264 = scalar_lea.vmem %s3, %s263
        %s265 = smul.u32 4, %s20
        %s266 = smul.u32 4, %s22
        %s267 = smul.u32 64, %s22
        %p268 = scmp.lt.s32.totalorder %s267, 255
        %s269 = scalar_select %p268, %s267, 255
        %p270 = scmp.lt.s32.totalorder %s21, 0
        %s271 = scalar_select %p270, %s21, 0
        %s272 = sadd.s32 %s271, %s269
        %s273 = smul.addr %s272, 4
        %s274 = scalar_lea.vmem %s1, %s273
        %s275 = smul.u32 64, %s22
        %s276 = smul.u32 4, %s20
        %p277 = scmp.lt.s32.totalorder %s276, 3
        %s278 = scalar_select %p277, %s276, 3
        %p279 = scmp.lt.s32.totalorder %s21, 0
        %s280 = scalar_select %p279, %s21, 0
        %s281 = sadd.s32 %s280, %s278
        %s282 = smul.addr %s281, 4
        %s283 = scalar_lea.vmem %s2, %s282
        %s284 = smul.u32 4, %s20
        %p285 = scmp.lt.s32.totalorder %s20, 0
        %s286 = scalar_select %p285, %s20, 0
        %p287 = scmp.lt.s32.totalorder %s21, 0
        %s288 = scalar_select %p287, %s21, 0
        %s289 = sadd.s32 %s288, %s286
        %s290 = smul.addr %s289, 8
        %s291 = scalar_lea.vmem %s3, %s290
        %p293 = scmp.eq.s32.totalorder %s22, 0
        // Predicated region
        $region52: #{discriminator_forward.6} parent=46 // pred_check
          %p294 = pneg %p293
        $region53: #{discriminator_forward.6} parent=46 // pred_check_branch
          %296 = sbr.rel (%p294) target = $region55
        $region54: #{discriminator_forward.6} parent=46 // pred_region
          %297 = vst [vmem:[#allocation2] sm:$0xff] 0.0
          %298 = vst [vmem:[#allocation2 + $0x8] sm:$0xff] 0.0
          %299 = vst [vmem:[#allocation2 + $0x10] sm:$0xff] 0.0
          %300 = vst [vmem:[#allocation2 + $0x18] sm:$0xff] 0.0
        $region55: #{discriminator_forward.6} parent=46 // pred_fallthru
          _
        %v301 = vld [vmem:[#allocation2] sm:$0xff]
        %v302 = vld [vmem:[#allocation2 + $0x8] sm:$0xff]
        %v303 = vld [vmem:[#allocation2 + $0x10] sm:$0xff]
        %v304 = vld [vmem:[#allocation2 + $0x18] sm:$0xff]
        %v305 = vld [vmem:[%s226] sm:$0xff]
        %v306 = vld [vmem:[%s226 + $0x8] sm:$0xff]
        %v307 = vld [vmem:[%s226 + $0x10] sm:$0xff]
        %v308 = vld [vmem:[%s226 + $0x18] sm:$0xff]
        %v309 = vld [vmem:[%s226 + $0x20] sm:$0xff]
        %v310 = vld [vmem:[%s226 + $0x28] sm:$0xff]
        %v311 = vld [vmem:[%s226 + $0x30] sm:$0xff]
        %v312 = vld [vmem:[%s226 + $0x38] sm:$0xff]
        %v313 = vld [vmem:[%s274] sm:$0xf]
        %v314 = vld [vmem:[%s274 + $0x4] sm:$0xf]
        %v315 = vld [vmem:[%s274 + $0x8] sm:$0xf]
        %v316 = vld [vmem:[%s274 + $0xc] sm:$0xf]
        %v317 = vld [vmem:[%s274 + $0x10] sm:$0xf]
        %v318 = vld [vmem:[%s274 + $0x14] sm:$0xf]
        %v319 = vld [vmem:[%s274 + $0x18] sm:$0xf]
        %v320 = vld [vmem:[%s274 + $0x1c] sm:$0xf]
        %v321 = vld [vmem:[%s274 + $0x20] sm:$0xf]
        %v322 = vld [vmem:[%s274 + $0x24] sm:$0xf]
        %v323 = vld [vmem:[%s274 + $0x28] sm:$0xf]
        %v324 = vld [vmem:[%s274 + $0x2c] sm:$0xf]
        %v325 = vld [vmem:[%s274 + $0x30] sm:$0xf]
        %v326 = vld [vmem:[%s274 + $0x34] sm:$0xf]
        %v327 = vld [vmem:[%s274 + $0x38] sm:$0xf]
        %v328 = vld [vmem:[%s274 + $0x3c] sm:$0xf]
        %v329 = vld [vmem:[%s274 + $0x40] sm:$0xf]
        %v330 = vld [vmem:[%s274 + $0x44] sm:$0xf]
        %v331 = vld [vmem:[%s274 + $0x48] sm:$0xf]
        %v332 = vld [vmem:[%s274 + $0x4c] sm:$0xf]
        %v333 = vld [vmem:[%s274 + $0x50] sm:$0xf]
        %v334 = vld [vmem:[%s274 + $0x54] sm:$0xf]
        %v335 = vld [vmem:[%s274 + $0x58] sm:$0xf]
        %v336 = vld [vmem:[%s274 + $0x5c] sm:$0xf]
        %v337 = vld [vmem:[%s274 + $0x60] sm:$0xf]
        %v338 = vld [vmem:[%s274 + $0x64] sm:$0xf]
        %v339 = vld [vmem:[%s274 + $0x68] sm:$0xf]
        %v340 = vld [vmem:[%s274 + $0x6c] sm:$0xf]
        %v341 = vld [vmem:[%s274 + $0x70] sm:$0xf]
        %v342 = vld [vmem:[%s274 + $0x74] sm:$0xf]
        %v343 = vld [vmem:[%s274 + $0x78] sm:$0xf]
        %v344 = vld [vmem:[%s274 + $0x7c] sm:$0xf]
        %v345 = vld [vmem:[%s274 + $0x80] sm:$0xf]
        %v346 = vld [vmem:[%s274 + $0x84] sm:$0xf]
        %v347 = vld [vmem:[%s274 + $0x88] sm:$0xf]
        %v348 = vld [vmem:[%s274 + $0x8c] sm:$0xf]
        %v349 = vld [vmem:[%s274 + $0x90] sm:$0xf]
        %v350 = vld [vmem:[%s274 + $0x94] sm:$0xf]
        %v351 = vld [vmem:[%s274 + $0x98] sm:$0xf]
        %v352 = vld [vmem:[%s274 + $0x9c] sm:$0xf]
        %v353 = vld [vmem:[%s274 + $0xa0] sm:$0xf]
        %v354 = vld [vmem:[%s274 + $0xa4] sm:$0xf]
        %v355 = vld [vmem:[%s274 + $0xa8] sm:$0xf]
        %v356 = vld [vmem:[%s274 + $0xac] sm:$0xf]
        %v357 = vld [vmem:[%s274 + $0xb0] sm:$0xf]
        %v358 = vld [vmem:[%s274 + $0xb4] sm:$0xf]
        %v359 = vld [vmem:[%s274 + $0xb8] sm:$0xf]
        %v360 = vld [vmem:[%s274 + $0xbc] sm:$0xf]
        %v361 = vld [vmem:[%s274 + $0xc0] sm:$0xf]
        %v362 = vld [vmem:[%s274 + $0xc4] sm:$0xf]
        %v363 = vld [vmem:[%s274 + $0xc8] sm:$0xf]
        %v364 = vld [vmem:[%s274 + $0xcc] sm:$0xf]
        %v365 = vld [vmem:[%s274 + $0xd0] sm:$0xf]
        %v366 = vld [vmem:[%s274 + $0xd4] sm:$0xf]
        %v367 = vld [vmem:[%s274 + $0xd8] sm:$0xf]
        %v368 = vld [vmem:[%s274 + $0xdc] sm:$0xf]
        %v369 = vld [vmem:[%s274 + $0xe0] sm:$0xf]
        %v370 = vld [vmem:[%s274 + $0xe4] sm:$0xf]
        %v371 = vld [vmem:[%s274 + $0xe8] sm:$0xf]
        %v372 = vld [vmem:[%s274 + $0xec] sm:$0xf]
        %v373 = vld [vmem:[%s274 + $0xf0] sm:$0xf]
        %v374 = vld [vmem:[%s274 + $0xf4] sm:$0xf]
        %v375 = vld [vmem:[%s274 + $0xf8] sm:$0xf]
        %v376 = vld [vmem:[%s274 + $0xfc] sm:$0xf]
        %v385 = vunpack.c.l.b16 %v305
        %v386 = vunpack.c.h.b16 %v305
        %v387 = vunpack.c.l.b16 %v306
        %v388 = vunpack.c.h.b16 %v306
        %v389 = vunpack.c.l.b16 %v307
        %v390 = vunpack.c.h.b16 %v307
        %v391 = vunpack.c.l.b16 %v308
        %v392 = vunpack.c.h.b16 %v308
        %v393 = vunpack.c.l.b16 %v309
        %v394 = vunpack.c.h.b16 %v309
        %v395 = vunpack.c.l.b16 %v310
        %v396 = vunpack.c.h.b16 %v310
        %v397 = vunpack.c.l.b16 %v311
        %v398 = vunpack.c.h.b16 %v311
        %v399 = vunpack.c.l.b16 %v312
        %v400 = vunpack.c.h.b16 %v312
        %v401 = vpack.c.b16 %v389, %v385
        %v402 = vpack.c.b16 %v390, %v386
        %v403 = vpack.c.b16 %v391, %v387
        %v404 = vpack.c.b16 %v392, %v388
        %v405 = vpack.c.b16 %v397, %v393
        %v406 = vpack.c.b16 %v398, %v394
        %v407 = vpack.c.b16 %v399, %v395
        %v408 = vpack.c.b16 %v400, %v396
        %v481 = vunpack.c.l.b16 %v313
        %v482 = vunpack.c.l.b16 %v314
        %v483 = vunpack.c.l.b16 %v315
        %v484 = vunpack.c.l.b16 %v316
        %v485 = vunpack.c.l.b16 %v317
        %v486 = vunpack.c.l.b16 %v318
        %v487 = vunpack.c.l.b16 %v319
        %v488 = vunpack.c.l.b16 %v320
        %v489 = vunpack.c.l.b16 %v321
        %v490 = vunpack.c.l.b16 %v322
        %v491 = vunpack.c.l.b16 %v323
        %v492 = vunpack.c.l.b16 %v324
        %v493 = vunpack.c.l.b16 %v325
        %v494 = vunpack.c.l.b16 %v326
        %v495 = vunpack.c.l.b16 %v327
        %v496 = vunpack.c.l.b16 %v328
        %v497 = vunpack.c.l.b16 %v329
        %v498 = vunpack.c.l.b16 %v330
        %v499 = vunpack.c.l.b16 %v331
        %v500 = vunpack.c.l.b16 %v332
        %v501 = vunpack.c.l.b16 %v333
        %v502 = vunpack.c.l.b16 %v334
        %v503 = vunpack.c.l.b16 %v335
        %v504 = vunpack.c.l.b16 %v336
        %v505 = vunpack.c.l.b16 %v337
        %v506 = vunpack.c.l.b16 %v338
        %v507 = vunpack.c.l.b16 %v339
        %v508 = vunpack.c.l.b16 %v340
        %v509 = vunpack.c.l.b16 %v341
        %v510 = vunpack.c.l.b16 %v342
        %v511 = vunpack.c.l.b16 %v343
        %v512 = vunpack.c.l.b16 %v344
        %v513 = vunpack.c.l.b16 %v345
        %v514 = vunpack.c.l.b16 %v346
        %v515 = vunpack.c.l.b16 %v347
        %v516 = vunpack.c.l.b16 %v348
        %v517 = vunpack.c.l.b16 %v349
        %v518 = vunpack.c.l.b16 %v350
        %v519 = vunpack.c.l.b16 %v351
        %v520 = vunpack.c.l.b16 %v352
        %v521 = vunpack.c.l.b16 %v353
        %v522 = vunpack.c.l.b16 %v354
        %v523 = vunpack.c.l.b16 %v355
        %v524 = vunpack.c.l.b16 %v356
        %v525 = vunpack.c.l.b16 %v357
        %v526 = vunpack.c.l.b16 %v358
        %v527 = vunpack.c.l.b16 %v359
        %v528 = vunpack.c.l.b16 %v360
        %v529 = vunpack.c.l.b16 %v361
        %v530 = vunpack.c.l.b16 %v362
        %v531 = vunpack.c.l.b16 %v363
        %v532 = vunpack.c.l.b16 %v364
        %v533 = vunpack.c.l.b16 %v365
        %v534 = vunpack.c.l.b16 %v366
        %v535 = vunpack.c.l.b16 %v367
        %v536 = vunpack.c.l.b16 %v368
        %v537 = vunpack.c.l.b16 %v369
        %v538 = vunpack.c.l.b16 %v370
        %v539 = vunpack.c.l.b16 %v371
        %v540 = vunpack.c.l.b16 %v372
        %v541 = vunpack.c.l.b16 %v373
        %v542 = vunpack.c.l.b16 %v374
        %v543 = vunpack.c.l.b16 %v375
        %v544 = vunpack.c.l.b16 %v376
        %v545 = vpack.c.b16 %v482, %v481
        %v546 = vpack.c.b16 %v484, %v483
        %v547 = vpack.c.b16 %v486, %v485
        %v548 = vpack.c.b16 %v488, %v487
        %v549 = vpack.c.b16 %v490, %v489
        %v550 = vpack.c.b16 %v492, %v491
        %v551 = vpack.c.b16 %v494, %v493
        %v552 = vpack.c.b16 %v496, %v495
        %v553 = vpack.c.b16 %v498, %v497
        %v554 = vpack.c.b16 %v500, %v499
        %v555 = vpack.c.b16 %v502, %v501
        %v556 = vpack.c.b16 %v504, %v503
        %v557 = vpack.c.b16 %v506, %v505
        %v558 = vpack.c.b16 %v508, %v507
        %v559 = vpack.c.b16 %v510, %v509
        %v560 = vpack.c.b16 %v512, %v511
        %v561 = vpack.c.b16 %v514, %v513
        %v562 = vpack.c.b16 %v516, %v515
        %v563 = vpack.c.b16 %v518, %v517
        %v564 = vpack.c.b16 %v520, %v519
        %v565 = vpack.c.b16 %v522, %v521
        %v566 = vpack.c.b16 %v524, %v523
        %v567 = vpack.c.b16 %v526, %v525
        %v568 = vpack.c.b16 %v528, %v527
        %v569 = vpack.c.b16 %v530, %v529
        %v570 = vpack.c.b16 %v532, %v531
        %v571 = vpack.c.b16 %v534, %v533
        %v572 = vpack.c.b16 %v536, %v535
        %v573 = vpack.c.b16 %v538, %v537
        %v574 = vpack.c.b16 %v540, %v539
        %v575 = vpack.c.b16 %v542, %v541
        %v576 = vpack.c.b16 %v544, %v543
        %609 = vmatprep.subr.bf16.mxu0 0
        %610 = vmatpush1.bf16.msra.mxu0 %v552
        %611 = vmatprep.subr.bf16.mxu0 0
        %612 = vmatpush1.bf16.msra.mxu0 %v551
        %613 = vmatprep.subr.bf16.mxu0 0
        %614 = vmatpush1.bf16.msra.mxu0 %v550
        %615 = vmatprep.subr.bf16.mxu0 0
        %616 = vmatpush1.bf16.msra.mxu0 %v549
        %617 = vmatprep.subr.bf16.mxu0 0
        %618 = vmatpush1.bf16.msra.mxu0 %v548
        %619 = vmatprep.subr.bf16.mxu0 0
        %620 = vmatpush1.bf16.msra.mxu0 %v547
        %621 = vmatprep.subr.bf16.mxu0 0
        %622 = vmatpush1.bf16.msra.mxu0 %v546
        %623 = vmatprep.subr.bf16.mxu0 0
        %624 = vmatpush1.bf16.msra.mxu0 %v545
        %625 = vmatprep.subr.bf16.mxu0 0
        %626 = vmatpush2.bf16.msra.mxu0 %v560
        %627 = vmatprep.subr.bf16.mxu0 0
        %628 = vmatpush2.bf16.msra.mxu0 %v559
        %629 = vmatprep.subr.bf16.mxu0 0
        %630 = vmatpush2.bf16.msra.mxu0 %v558
        %631 = vmatprep.subr.bf16.mxu0 0
        %632 = vmatpush2.bf16.msra.mxu0 %v557
        %633 = vmatprep.subr.bf16.mxu0 0
        %634 = vmatpush2.bf16.msra.mxu0 %v556
        %635 = vmatprep.subr.bf16.mxu0 0
        %636 = vmatpush2.bf16.msra.mxu0 %v555
        %637 = vmatprep.subr.bf16.mxu0 0
        %638 = vmatpush2.bf16.msra.mxu0 %v554
        %639 = vmatprep.subr.bf16.mxu0 0
        %640 = vmatpush2.bf16.msra.mxu0 %v553
        %641 = vmatprep.mubr.bf16.mxu0 %v402
        %642 = vmatmul.mubr.bf16.gmra.mxu0 %v401
        %v643 = vpop.f32.mrf.mxu0
        %v644 = vadd.f32 0.0, %v643
        %v645 = vpop.f32.mrf.mxu0
        %v646 = vpop.f32.mrf.mxu0
        %v647 = vadd.f32 0.0, %v646
        %v648 = vpop.f32.mrf.mxu0
        %649 = vmatprep.mubr.bf16.mxu0 %v406
        %650 = vmatmul.mubr.bf16.gmra.mxu0 %v405
        %v651 = vpop.f32.mrf.mxu0
        %v652 = vadd.f32 0.0, %v651
        %v653 = vpop.f32.mrf.mxu0
        %v654 = vpop.f32.mrf.mxu0
        %v655 = vadd.f32 0.0, %v654
        %v656 = vpop.f32.mrf.mxu0
        %657 = vdwg.mxu0
        %658 = vmatprep.subr.bf16.mxu0 0
        %659 = vmatpush1.bf16.msra.mxu0 %v568
        %660 = vmatprep.subr.bf16.mxu0 0
        %661 = vmatpush1.bf16.msra.mxu0 %v567
        %662 = vmatprep.subr.bf16.mxu0 0
        %663 = vmatpush1.bf16.msra.mxu0 %v566
        %664 = vmatprep.subr.bf16.mxu0 0
        %665 = vmatpush1.bf16.msra.mxu0 %v565
        %666 = vmatprep.subr.bf16.mxu0 0
        %667 = vmatpush1.bf16.msra.mxu0 %v564
        %668 = vmatprep.subr.bf16.mxu0 0
        %669 = vmatpush1.bf16.msra.mxu0 %v563
        %670 = vmatprep.subr.bf16.mxu0 0
        %671 = vmatpush1.bf16.msra.mxu0 %v562
        %672 = vmatprep.subr.bf16.mxu0 0
        %673 = vmatpush1.bf16.msra.mxu0 %v561
        %674 = vmatprep.subr.bf16.mxu0 0
        %675 = vmatpush2.bf16.msra.mxu0 %v576
        %676 = vmatprep.subr.bf16.mxu0 0
        %677 = vmatpush2.bf16.msra.mxu0 %v575
        %678 = vmatprep.subr.bf16.mxu0 0
        %679 = vmatpush2.bf16.msra.mxu0 %v574
        %680 = vmatprep.subr.bf16.mxu0 0
        %681 = vmatpush2.bf16.msra.mxu0 %v573
        %682 = vmatprep.subr.bf16.mxu0 0
        %683 = vmatpush2.bf16.msra.mxu0 %v572
        %684 = vmatprep.subr.bf16.mxu0 0
        %685 = vmatpush2.bf16.msra.mxu0 %v571
        %686 = vmatprep.subr.bf16.mxu0 0
        %687 = vmatpush2.bf16.msra.mxu0 %v570
        %688 = vmatprep.subr.bf16.mxu0 0
        %689 = vmatpush2.bf16.msra.mxu0 %v569
        %690 = vmatprep.mubr.bf16.mxu0 %v404
        %691 = vmatmul.mubr.bf16.gmra.mxu0 %v403
        %v692 = vpop.f32.mrf.mxu0
        %v693 = vadd.f32 %v644, %v692
        %v694 = vpop.f32.mrf.mxu0
        %v695 = vpop.f32.mrf.mxu0
        %v696 = vadd.f32 %v647, %v695
        %v697 = vpop.f32.mrf.mxu0
        %698 = vmatprep.mubr.bf16.mxu0 %v408
        %699 = vmatmul.mubr.bf16.gmra.mxu0 %v407
        %v700 = vpop.f32.mrf.mxu0
        %v701 = vadd.f32 %v652, %v700
        %v702 = vpop.f32.mrf.mxu0
        %v703 = vpop.f32.mrf.mxu0
        %v704 = vadd.f32 %v655, %v703
        %v705 = vpop.f32.mrf.mxu0
        %706 = vdwg.mxu0
        %v707 = vadd.f32 %v301, %v693
        %v708 = vadd.f32 %v302, %v696
        %v709 = vadd.f32 %v303, %v701
        %v710 = vadd.f32 %v304, %v704
        %711 = vst [vmem:[#allocation2] sm:$0xff] %v707
        %712 = vst [vmem:[#allocation2 + $0x8] sm:$0xff] %v708
        %713 = vst [vmem:[#allocation2 + $0x10] sm:$0xff] %v709
        %714 = vst [vmem:[#allocation2 + $0x18] sm:$0xff] %v710
        %p715 = scmp.eq.s32.totalorder %s22, 3
        // Predicated region
        $region56: #{discriminator_forward.6} parent=46 // pred_check
          %p716 = pneg %p715
        $region57: #{discriminator_forward.6} parent=46 // pred_check_branch
          %718 = sbr.rel (%p716) target = $region59
        $region58: #{discriminator_forward.6} parent=46 // pred_region
          %v719 = vld [vmem:[#allocation2] sm:$0xff]
          %v720 = vld [vmem:[#allocation2 + $0x8] sm:$0xff]
          %v721 = vld [vmem:[#allocation2 + $0x10] sm:$0xff]
          %v722 = vld [vmem:[#allocation2 + $0x18] sm:$0xff]
          %v723 = vpack.c.bf16 %v720, %v719
          %v724 = vpack.c.bf16 %v722, %v721
          %v727 = vunpack.c.l.b16 %v723
          %v728 = vunpack.c.h.b16 %v723
          %v729 = vunpack.c.l.b16 %v724
          %v730 = vunpack.c.h.b16 %v724
          %v731 = vpack.c.b16 %v727, %v727
          %v732 = vpack.c.b16 %v728, %v728
          %v733 = vpack.c.b16 %v729, %v729
          %v734 = vpack.c.b16 %v730, %v730
          %739 = vst [vmem:[%s283] sm:$0xf] %v731
          %740 = vst [vmem:[%s283 + $0x4] sm:$0xf] %v732
          %741 = vst [vmem:[%s283 + $0x8] sm:$0xf] %v733
          %742 = vst [vmem:[%s283 + $0xc] sm:$0xf] %v734
          %v743 = vadd.f32 %v719, %v720
          %v744 = vadd.f32 %v743, %v721
          %v745 = vadd.f32 %v744, %v722
          %v746 = vrot.slane %v745, 4
          %v747 = vadd.f32 %v745, %v746
          %v748 = vrot.slane %v747, 2
          %v749 = vadd.f32 %v747, %v748
          %v750 = vrot.slane %v749, 1
          %v751 = vadd.f32 %v749, %v750
          %v752 = vmul.f32 %v719, %v719
          %v753 = vmul.f32 %v720, %v720
          %v754 = vmul.f32 %v721, %v721
          %v755 = vmul.f32 %v722, %v722
          %v756 = vadd.f32 %v752, %v753
          %v757 = vadd.f32 %v756, %v754
          %v758 = vadd.f32 %v757, %v755
          %v759 = vrot.slane %v758, 4
          %v760 = vadd.f32 %v758, %v759
          %v761 = vrot.slane %v760, 2
          %v762 = vadd.f32 %v760, %v761
          %v763 = vrot.slane %v762, 1
          %v764 = vadd.f32 %v762, %v763
          %v765 = vlaneseq
          %v766 = vshrl.u32 %v765, 7
          %vm767 = vcmp.eq.s32.totalorder %v766, 0
          %vm768 = vcmp.eq.s32.totalorder %v766, 1
          %v769 = vsel %vm768, %v764, 0.0
          %v770 = vsel %vm767, %v751, %v769
          %771 = vst [vmem:[%s291] sm:$0xff] %v770
        $region59: #{discriminator_forward.6} parent=46 // pred_fallthru
          _
        %s772 = smul.u32 4, %s20
        %p773 = scmp.lt.s32.totalorder %s772, 3
        %s774 = scalar_select %p773, %s772, 3
        %p775 = scmp.lt.s32.totalorder %s21, 0
        %s776 = scalar_select %p775, %s21, 0
        %s777 = sadd.s32 %s776, %s774
        %s778 = smul.addr %s777, 4
        %s779 = scalar_lea.vmem %s2, %s778
        %p780 = scmp.lt.s32.totalorder %s20, 0
        %s781 = scalar_select %p780, %s20, 0
        %p782 = scmp.lt.s32.totalorder %s21, 0
        %s783 = scalar_select %p782, %s21, 0
        %s784 = sadd.s32 %s783, %s781
        %s785 = smul.addr %s784, 8
        %s786 = scalar_lea.vmem %s3, %s785
        // Predicated region
        $region60: #{discriminator_forward.6} parent=46 // pred_check
          %p787 = pneg %p110
        $region61: #{discriminator_forward.6} parent=46 // pred_check_branch
          %789 = sbr.rel (%p787) target = $region63
        $region62: #{discriminator_forward.6} parent=46 // pred_region
          %s790 = smul.u32 4, %s20
        $region63: #{discriminator_forward.6} parent=46 // pred_fallthru
          _
        // Predicated region
        $region64: #{discriminator_forward.6} parent=46 // pred_check
          %p791 = pneg %p138
        $region65: #{discriminator_forward.6} parent=46 // pred_check_branch
          %793 = sbr.rel (%p791) target = $region67
        $region66: #{discriminator_forward.6} parent=46 // pred_region
          _
        $region67: #{discriminator_forward.6} parent=46 // pred_fallthru
          _
        // Predicated region
        $region68: #{discriminator_forward.6} parent=46 // pred_check
          %p794 = pneg %p110
        $region69: #{discriminator_forward.6} parent=46 // pred_check_branch
          %796 = sbr.rel (%p794) target = $region71
        $region70: #{discriminator_forward.6} parent=46 // pred_region
          %s797 = smul.u32 4, %s20
          %p798 = scmp.lt.s32.totalorder %s797, 3
          %s799 = scalar_select %p798, %s797, 3
          %p800 = scmp.lt.s32.totalorder %s21, 0
          %s801 = scalar_select %p800, %s21, 0
          %s802 = sadd.s32 %s801, %s799
          %s803 = smul.addr %s802, 4
          %s804 = scalar_lea.vmem %s2, %s803
        $region71: #{discriminator_forward.6} parent=46 // pred_fallthru
          _
        // Predicated region
        $region72: #{discriminator_forward.6} parent=46 // pred_check
          %p805 = pneg %p138
        $region73: #{discriminator_forward.6} parent=46 // pred_check_branch
          %807 = sbr.rel (%p805) target = $region75
        $region74: #{discriminator_forward.6} parent=46 // pred_region
          %p808 = scmp.lt.s32.totalorder %s20, 0
          %s809 = scalar_select %p808, %s20, 0
          %p810 = scmp.lt.s32.totalorder %s21, 0
          %s811 = scalar_select %p810, %s21, 0
          %s812 = sadd.s32 %s811, %s809
          %s813 = smul.addr %s812, 8
          %s814 = scalar_lea.vmem %s3, %s813
        $region75: #{discriminator_forward.6} parent=46 // pred_fallthru
          _
      $region47: #{discriminator_forward.6} parent=5 // pred_fallthru
        _
      %p815 = scmp.le.s32.totalorder 2, %s10
      // Predicated region
      $region76: #{discriminator_forward.6} parent=5 // pred_check
        %p816 = pneg %p815
      $region77: #{discriminator_forward.6} parent=5 // pred_check_branch
        %818 = sbr.rel (%p816) target = $region79
      $region78: #{discriminator_forward.6} parent=5 // pred_region
        %s819 = ssub.s32 %s10, 2
      $region79: #{discriminator_forward.6} parent=5 // pred_fallthru
        _
    $region6: #{discriminator_forward.6} parent=1 // loop_footer
      %s14 = sadd.s32 1, %s10
    $region7: #{discriminator_forward.6} parent=1 // loop_footer_branch
      %9 = sbr.rel target = $region3
    $region8: #{discriminator_forward.6} parent=1 // loop_exit
      _

// kernel: discriminator_forward.9
$region0: #{discriminator_forward.9}
  #allocation0 [shape = 'u32[]', space=smem, size = 0x4, offset = 0x4, fixed_abs, tag = 'smem constant byte address 0x4 - core index']
  #allocation1 [shape = 'u32[144,128]{1,0:T(1,128)}', space=vmem, size = 0x12000, scoped, tag = 'internal scratch']
  %s0 = inlined_call_operand.vmem [shape: bf16[8,128], index: 0, kind: input, shape index: {}]
  %s1 = inlined_call_operand.vmem [shape: f32[1,128], index: 1, kind: input, shape index: {}]
  %s2 = inlined_call_operand.vmem [shape: f32[1,128], index: 2, kind: input, shape index: {}]
  %s3 = inlined_call_operand.vmem [shape: bf16[8,128], index: 3, kind: output, shape index: {}]
  %s4 = sld [smem:[#allocation0]]
  $region22: #{discriminator_forward.9} parent=0
    _
  %s6 = ssub.s32 1, %s4
  %s7 = scalar_select 0, %s6, %s4
  // Predicated region
  $region2: #{discriminator_forward.9} parent=0 // pred_check
    _
  $region3: #{discriminator_forward.9} parent=0 // pred_check_branch
    %9 = sbr.rel (0) target = $region5
  $region4: #{discriminator_forward.9} parent=0 // pred_region
    _
  $region5: #{discriminator_forward.9} parent=0 // pred_fallthru
    _
  // Predicated region
  $region6: #{discriminator_forward.9} parent=0 // pred_check
    _
  $region7: #{discriminator_forward.9} parent=0 // pred_check_branch
    %11 = sbr.rel (0) target = $region9
  $region8: #{discriminator_forward.9} parent=0 // pred_region
    _
  $region9: #{discriminator_forward.9} parent=0 // pred_fallthru
    _
  // Predicated region
  $region10: #{discriminator_forward.9} parent=0 // pred_check
    _
  $region11: #{discriminator_forward.9} parent=0 // pred_check_branch
    %13 = sbr.rel (0) target = $region13
  $region12: #{discriminator_forward.9} parent=0 // pred_region
    _
  $region13: #{discriminator_forward.9} parent=0 // pred_fallthru
    _
  %v14 = vld [vmem:[%s0] sm:$0xf]
  %v15 = vunpack.c.l.bf16 %v14
  %v16 = vld [vmem:[%s1] sm:$0x1]
  %v18 = vlaneseq
  %v19 = vshrl.u32 %v18, 7
  %v20 = vsub.s32 0, %v19
  %v21 = vrot.slane %v16, %v20
  %v23 = vmul.f32 %v15, %v21
  %v24 = vld [vmem:[%s2] sm:$0x1]
  %v26 = vlaneseq
  %v27 = vshrl.u32 %v26, 7
  %v28 = vsub.s32 0, %v27
  %v29 = vrot.slane %v24, %v28
  %v31 = vadd.f32 %v23, %v29
  %v32 = vmax.f32 %v31, 0.0
  %v33 = vpack.c.bf16 %v32, %v32
  %34 = vst [vmem:[%s3] sm:$0xf] %v33
  // Predicated region
  $region14: #{discriminator_forward.9} parent=0 // pred_check
    _
  $region15: #{discriminator_forward.9} parent=0 // pred_check_branch
    %36 = sbr.rel (0) target = $region17
  $region16: #{discriminator_forward.9} parent=0 // pred_region
    _
  $region17: #{discriminator_forward.9} parent=0 // pred_fallthru
    _
  // Predicated region
  $region18: #{discriminator_forward.9} parent=0 // pred_check
    _
  $region19: #{discriminator_forward.9} parent=0 // pred_check_branch
    %38 = sbr.rel (0) target = $region21
  $region20: #{discriminator_forward.9} parent=0 // pred_region
    _
  $region21: #{discriminator_forward.9} parent=0 // pred_fallthru
    _

// kernel: discriminator_forward.8
$region0: #{discriminator_forward.8}
  #allocation0 [shape = 'u32[]', space=smem, size = 0x4, offset = 0x4, fixed_abs, tag = 'smem constant byte address 0x4 - core index']
  #allocation1 [shape = 'u32[144,128]{1,0:T(1,128)}', space=vmem, size = 0x12000, scoped, tag = 'internal scratch']
  #allocation2 [shape = 'f32[8,128]{1,0:T(8,128)}', space=vmem, size = 0x1000, scoped, tag = 'scratch operand']
  %s0 = inlined_call_operand.vmem [shape: bf16[8,2048], index: 0, kind: input, shape index: {}]
  %s1 = inlined_call_operand.vmem [shape: bf16[2048,128], index: 1, kind: input, shape index: {}]
  %s2 = inlined_call_operand.vmem [shape: bf16[8,128], index: 2, kind: output, shape index: {0}]
  %s3 = inlined_call_operand.vmem [shape: f32[8,128], index: 3, kind: output, shape index: {1}]
  %4 = xla_tuple %s2, %s3
  %s5 = sld [smem:[#allocation0]]
  $region57: #{discriminator_forward.8} parent=0
    _
  %s7 = ssub.s32 1, %s5
  %s8 = scalar_select 0, %s7, %s5
  loop: start=0, step=1, limit=6
  $region2: #{discriminator_forward.8} parent=0 // loop_pre_header
    _
  $region3: #{discriminator_forward.8} parent=0 // loop_header
    %s10 = sphi 0, %s14
    %p11 = scmp.ge.s32.totalorder %s10, 6
    %s17 = sphi 0, %s36
    %s18 = sphi 0, %s32
    %s19 = sphi 0, %s28
    %s20 = sphi 0, %s17
    %s21 = sphi 0, %s18
    %s22 = sphi 0, %s19
    %s23 = sphi 0, %s20
    %s24 = sphi 0, %s21
    %s25 = sphi 0, %s22
    %s41 = sphi 0, %s43
    %s44 = sphi 0, %s41
    %s45 = sphi 0, %s44
    %s61 = sphi 0, %s45
    %s69 = sphi 0, %s71
    %s72 = sphi 0, %s69
    %s73 = sphi 0, %s72
    %s89 = sphi 0, %s73
    %s97 = sphi 0, %s99
    %s100 = sphi 0, %s97
    %s101 = sphi 0, %s100
    %s117 = sphi 0, %s101
    %s125 = sphi 0, %s127
    %s128 = sphi 0, %s125
    %s129 = sphi 0, %s128
    %s145 = sphi 0, %s129
  $region4: #{discriminator_forward.8} parent=0 // loop_header_branch
    %13 = sbr.rel (%p11) target = $region8
  $region5: #{discriminator_forward.8} parent=0 // loop_body
    %s15 = ssub.s32 %s10, 1
    %s16 = ssub.s32 %s10, 2
    %s26 = sadd.s32 1, %s19
    %p27 = scmp.ge.s32.totalorder %s26, 4
    %s28 = scalar_select %p27, 0, %s26
    %s29 = sadd.s32 1, %s18
    %s30 = scalar_select %p27, %s29, %s18
    %p31 = scmp.ge.s32.totalorder %s30, 1
    %s32 = scalar_select %p31, 0, %s30
    %s33 = sadd.s32 1, %s17
    %s34 = scalar_select %p31, %s33, %s17
    %p35 = scmp.ge.s32.totalorder %s34, 1
    %s36 = scalar_select %p35, 0, %s34
    %s37 = ssub.s32 %s17, %s36
    %s38 = ssub.s32 %s19, %s28
    %s39 = sor.u32 %s37, %s38
    %p40 = scmp.eq.s32.totalorder %s39, 0
    %s42 = sadd.s32 %s41, 1
    %s43 = scalar_select %p40, %s41, %s42
    %p46 = pneg %p40
    %p47 = scmp.eq.s32.totalorder %s10, 3
    %p48 = por %p46, %p47
    %p49 = scmp.ne.s32.totalorder %s41, %s44
    %p50 = scmp.eq.s32.totalorder %s10, 0
    %p51 = por %p49, %p50
    %p52 = scmp.ne.s32.totalorder %s41, %s44
    %p53 = scmp.eq.s32.totalorder %s15, 3
    %p54 = por %p52, %p53
    %p55 = scmp.ne.s32.totalorder %s44, %s45
    %p56 = scmp.eq.s32.totalorder %s15, 0
    %p57 = por %p55, %p56
    %p58 = scmp.ne.s32.totalorder %s44, %s45
    %p59 = scmp.eq.s32.totalorder %s16, 3
    %p60 = por %p58, %p59
    %p62 = scmp.ne.s32.totalorder %s45, %s61
    %p63 = scmp.eq.s32.totalorder %s16, 0
    %p64 = por %p62, %p63
    %s65 = ssub.s32 %s19, %s28
    %s66 = ssub.s32 %s18, %s32
    %s67 = sor.u32 %s65, %s66
    %p68 = scmp.eq.s32.totalorder %s67, 0
    %s70 = sadd.s32 %s69, 1
    %s71 = scalar_select %p68, %s69, %s70
    %p74 = pneg %p68
    %p75 = scmp.eq.s32.totalorder %s10, 3
    %p76 = por %p74, %p75
    %p77 = scmp.ne.s32.totalorder %s69, %s72
    %p78 = scmp.eq.s32.totalorder %s10, 0
    %p79 = por %p77, %p78
    %p80 = scmp.ne.s32.totalorder %s69, %s72
    %p81 = scmp.eq.s32.totalorder %s15, 3
    %p82 = por %p80, %p81
    %p83 = scmp.ne.s32.totalorder %s72, %s73
    %p84 = scmp.eq.s32.totalorder %s15, 0
    %p85 = por %p83, %p84
    %p86 = scmp.ne.s32.totalorder %s72, %s73
    %p87 = scmp.eq.s32.totalorder %s16, 3
    %p88 = por %p86, %p87
    %p90 = scmp.ne.s32.totalorder %s73, %s89
    %p91 = scmp.eq.s32.totalorder %s16, 0
    %p92 = por %p90, %p91
    %s93 = ssub.s32 %s17, %s36
    %s94 = ssub.s32 %s18, %s32
    %s95 = sor.u32 %s93, %s94
    %p96 = scmp.eq.s32.totalorder %s95, 0
    %s98 = sadd.s32 %s97, 1
    %s99 = scalar_select %p96, %s97, %s98
    %p102 = pneg %p96
    %p103 = scmp.eq.s32.totalorder %s10, 3
    %p104 = por %p102, %p103
    %p105 = scmp.ne.s32.totalorder %s97, %s100
    %p106 = scmp.eq.s32.totalorder %s10, 0
    %p107 = por %p105, %p106
    %p108 = scmp.ne.s32.totalorder %s97, %s100
    %p109 = scmp.eq.s32.totalorder %s15, 3
    %p110 = por %p108, %p109
    %p111 = scmp.ne.s32.totalorder %s100, %s101
    %p112 = scmp.eq.s32.totalorder %s15, 0
    %p113 = por %p111, %p112
    %p114 = scmp.ne.s32.totalorder %s100, %s101
    %p115 = scmp.eq.s32.totalorder %s16, 3
    %p116 = por %p114, %p115
    %p118 = scmp.ne.s32.totalorder %s101, %s117
    %p119 = scmp.eq.s32.totalorder %s16, 0
    %p120 = por %p118, %p119
    %s121 = ssub.s32 %s17, %s36
    %s122 = ssub.s32 %s18, %s32
    %s123 = sor.u32 %s121, %s122
    %p124 = scmp.eq.s32.totalorder %s123, 0
    %s126 = sadd.s32 %s125, 1
    %s127 = scalar_select %p124, %s125, %s126
    %p130 = pneg %p124
    %p131 = scmp.eq.s32.totalorder %s10, 3
    %p132 = por %p130, %p131
    %p133 = scmp.ne.s32.totalorder %s125, %s128
    %p134 = scmp.eq.s32.totalorder %s10, 0
    %p135 = por %p133, %p134
    %p136 = scmp.ne.s32.totalorder %s125, %s128
    %p137 = scmp.eq.s32.totalorder %s15, 3
    %p138 = por %p136, %p137
    %p139 = scmp.ne.s32.totalorder %s128, %s129
    %p140 = scmp.eq.s32.totalorder %s15, 0
    %p141 = por %p139, %p140
    %p142 = scmp.ne.s32.totalorder %s128, %s129
    %p143 = scmp.eq.s32.totalorder %s16, 3
    %p144 = por %p142, %p143
    %p146 = scmp.ne.s32.totalorder %s129, %s145
    %p147 = scmp.eq.s32.totalorder %s16, 0
    %p148 = por %p146, %p147
    %p149 = scmp.le.s32.totalorder 1, %s10
    %p150 = scmp.lt.s32.totalorder %s10, 5
    %p151 = pnand %p149, %p150
    %p152 = pneg %p151
    // Predicated region
    $region9: #{discriminator_forward.8} parent=5 // pred_check
      _
    $region10: #{discriminator_forward.8} parent=5 // pred_check_branch
      %154 = sbr.rel (%p151) target = $region12
    $region11: #{discriminator_forward.8} parent=5 // pred_region
      %s155 = ssub.s32 %s10, 1
    $region12: #{discriminator_forward.8} parent=5 // pred_fallthru
      _
    %p156 = scmp.lt.s32.totalorder %s10, 4
    // Predicated region
    $region13: #{discriminator_forward.8} parent=5 // pred_check
      %p157 = pneg %p156
    $region14: #{discriminator_forward.8} parent=5 // pred_check_branch
      %159 = sbr.rel (%p157) target = $region16
    $region15: #{discriminator_forward.8} parent=5 // pred_region
      // Predicated region
      $region17: #{discriminator_forward.8} parent=15 // pred_check
        %p160 = pneg %p51
      $region18: #{discriminator_forward.8} parent=15 // pred_check_branch
        %162 = sbr.rel (%p160) target = $region20
      $region19: #{discriminator_forward.8} parent=15 // pred_region
        %s163 = smul.u32 4, %s19
        %p164 = scmp.lt.s32.totalorder %s17, 0
        %s165 = scalar_select %p164, %s17, 0
        %p166 = scmp.lt.s32.totalorder %s163, 15
        %s167 = scalar_select %p166, %s163, 15
        %s168 = smul.addr %s165, 16
        %s169 = sadd.s32 %s167, %s168
        %s170 = smul.addr %s169, 4
        %s171 = scalar_lea.vmem %s0, %s170
        %s172 = smul.u32 4, %s19
      $region20: #{discriminator_forward.8} parent=15 // pred_fallthru
        _
      // Predicated region
      $region21: #{discriminator_forward.8} parent=15 // pred_check
        %p173 = pneg %p79
      $region22: #{discriminator_forward.8} parent=15 // pred_check_branch
        %175 = sbr.rel (%p173) target = $region24
      $region23: #{discriminator_forward.8} parent=15 // pred_region
        %s176 = smul.u32 64, %s19
        %p177 = scmp.lt.s32.totalorder %s176, 255
        %s178 = scalar_select %p177, %s176, 255
        %p179 = scmp.lt.s32.totalorder %s18, 0
        %s180 = scalar_select %p179, %s18, 0
        %s181 = sadd.s32 %s180, %s178
        %s182 = smul.addr %s181, 4
        %s183 = scalar_lea.vmem %s1, %s182
        %s184 = smul.u32 64, %s19
      $region24: #{discriminator_forward.8} parent=15 // pred_fallthru
        _
    $region16: #{discriminator_forward.8} parent=5 // pred_fallthru
      _
    %p185 = scmp.le.s32.totalorder 1, %s10
    %p186 = scmp.lt.s32.totalorder %s10, 5
    %p187 = pnand %p185, %p186
    %p188 = pneg %p187
    // Predicated region
    $region25: #{discriminator_forward.8} parent=5 // pred_check
      _
    $region26: #{discriminator_forward.8} parent=5 // pred_check_branch
      %190 = sbr.rel (%p187) target = $region28
    $region27: #{discriminator_forward.8} parent=5 // pred_region
      %s191 = ssub.s32 %s10, 1
      %s192 = smul.u32 4, %s22
      %p193 = scmp.lt.s32.totalorder %s20, 0
      %s194 = scalar_select %p193, %s20, 0
      %p195 = scmp.lt.s32.totalorder %s192, 15
      %s196 = scalar_select %p195, %s192, 15
      %s197 = smul.addr %s194, 16
      %s198 = sadd.s32 %s196, %s197
      %s199 = smul.addr %s198, 4
      %s200 = scalar_lea.vmem %s0, %s199
      %p201 = pneg %p57
      %p202 = pneg %p54
      %s203 = smul.u32 64, %s22
      %p204 = scmp.lt.s32.totalorder %s203, 255
      %s205 = scalar_select %p204, %s203, 255
      %p206 = scmp.lt.s32.totalorder %s21, 0
      %s207 = scalar_select %p206, %s21, 0
      %s208 = sadd.s32 %s207, %s205
      %s209 = smul.addr %s208, 4
      %s210 = scalar_lea.vmem %s1, %s209
      %p211 = pneg %p85
      %p212 = pneg %p82
      %p213 = pneg %p113
      %p214 = pneg %p110
      %p215 = scmp.lt.s32.totalorder %s20, 0
      %s216 = scalar_select %p215, %s20, 0
      %p217 = scmp.lt.s32.totalorder %s21, 0
      %s218 = scalar_select %p217, %s21, 0
      %s219 = sadd.s32 %s218, %s216
      %s220 = smul.addr %s219, 4
      %s221 = scalar_lea.vmem %s2, %s220
      %p222 = pneg %p141
      %p223 = pneg %p138
      %p224 = scmp.lt.s32.totalorder %s20, 0
      %s225 = scalar_select %p224, %s20, 0
      %p226 = scmp.lt.s32.totalorder %s21, 0
      %s227 = scalar_select %p226, %s21, 0
      %s228 = sadd.s32 %s227, %s225
      %s229 = smul.addr %s228, 8
      %s230 = scalar_lea.vmem %s3, %s229
      %s231 = smul.u32 4, %s22
      %p232 = scmp.lt.s32.totalorder %s20, 0
      %s233 = scalar_select %p232, %s20, 0
      %p234 = scmp.lt.s32.totalorder %s231, 15
      %s235 = scalar_select %p234, %s231, 15
      %s236 = smul.addr %s233, 16
      %s237 = sadd.s32 %s235, %s236
      %s238 = smul.addr %s237, 4
      %s239 = scalar_lea.vmem %s0, %s238
      %s240 = smul.u32 4, %s22
      %s241 = smul.u32 64, %s22
      %p242 = scmp.lt.s32.totalorder %s241, 255
      %s243 = scalar_select %p242, %s241, 255
      %p244 = scmp.lt.s32.totalorder %s21, 0
      %s245 = scalar_select %p244, %s21, 0
      %s246 = sadd.s32 %s245, %s243
      %s247 = smul.addr %s246, 4
      %s248 = scalar_lea.vmem %s1, %s247
      %s249 = smul.u32 64, %s22
      %p250 = scmp.lt.s32.totalorder %s20, 0
      %s251 = scalar_select %p250, %s20, 0
      %p252 = scmp.lt.s32.totalorder %s21, 0
      %s253 = scalar_select %p252, %s21, 0
      %s254 = sadd.s32 %s253, %s251
      %s255 = smul.addr %s254, 4
      %s256 = scalar_lea.vmem %s2, %s255
      %p257 = scmp.lt.s32.totalorder %s20, 0
      %s258 = scalar_select %p257, %s20, 0
      %p259 = scmp.lt.s32.totalorder %s21, 0
      %s260 = scalar_select %p259, %s21, 0
      %s261 = sadd.s32 %s260, %s258
      %s262 = smul.addr %s261, 8
      %s263 = scalar_lea.vmem %s3, %s262
      %p265 = scmp.eq.s32.totalorder %s22, 0
      // Predicated region
      $region29: #{discriminator_forward.8} parent=27 // pred_check
        %p266 = pneg %p265
      $region30: #{discriminator_forward.8} parent=27 // pred_check_branch
        %268 = sbr.rel (%p266) target = $region32
      $region31: #{discriminator_forward.8} parent=27 // pred_region
        %269 = vst [vmem:[#allocation2] sm:$0xff] 0.0
      $region32: #{discriminator_forward.8} parent=27 // pred_fallthru
        _
      %v270 = vld [vmem:[#allocation2] sm:$0xff]
      %v271 = vld [vmem:[%s239] sm:$0xff]
      %v272 = vld [vmem:[%s239 + $0x8] sm:$0xff]
      %v273 = vld [vmem:[%s248] sm:$0xf]
      %v274 = vld [vmem:[%s248 + $0x4] sm:$0xf]
      %v275 = vld [vmem:[%s248 + $0x8] sm:$0xf]
      %v276 = vld [vmem:[%s248 + $0xc] sm:$0xf]
      %v277 = vld [vmem:[%s248 + $0x10] sm:$0xf]
      %v278 = vld [vmem:[%s248 + $0x14] sm:$0xf]
      %v279 = vld [vmem:[%s248 + $0x18] sm:$0xf]
      %v280 = vld [vmem:[%s248 + $0x1c] sm:$0xf]
      %v281 = vld [vmem:[%s248 + $0x20] sm:$0xf]
      %v282 = vld [vmem:[%s248 + $0x24] sm:$0xf]
      %v283 = vld [vmem:[%s248 + $0x28] sm:$0xf]
      %v284 = vld [vmem:[%s248 + $0x2c] sm:$0xf]
      %v285 = vld [vmem:[%s248 + $0x30] sm:$0xf]
      %v286 = vld [vmem:[%s248 + $0x34] sm:$0xf]
      %v287 = vld [vmem:[%s248 + $0x38] sm:$0xf]
      %v288 = vld [vmem:[%s248 + $0x3c] sm:$0xf]
      %v289 = vld [vmem:[%s248 + $0x40] sm:$0xf]
      %v290 = vld [vmem:[%s248 + $0x44] sm:$0xf]
      %v291 = vld [vmem:[%s248 + $0x48] sm:$0xf]
      %v292 = vld [vmem:[%s248 + $0x4c] sm:$0xf]
      %v293 = vld [vmem:[%s248 + $0x50] sm:$0xf]
      %v294 = vld [vmem:[%s248 + $0x54] sm:$0xf]
      %v295 = vld [vmem:[%s248 + $0x58] sm:$0xf]
      %v296 = vld [vmem:[%s248 + $0x5c] sm:$0xf]
      %v297 = vld [vmem:[%s248 + $0x60] sm:$0xf]
      %v298 = vld [vmem:[%s248 + $0x64] sm:$0xf]
      %v299 = vld [vmem:[%s248 + $0x68] sm:$0xf]
      %v300 = vld [vmem:[%s248 + $0x6c] sm:$0xf]
      %v301 = vld [vmem:[%s248 + $0x70] sm:$0xf]
      %v302 = vld [vmem:[%s248 + $0x74] sm:$0xf]
      %v303 = vld [vmem:[%s248 + $0x78] sm:$0xf]
      %v304 = vld [vmem:[%s248 + $0x7c] sm:$0xf]
      %v305 = vld [vmem:[%s248 + $0x80] sm:$0xf]
      %v306 = vld [vmem:[%s248 + $0x84] sm:$0xf]
      %v307 = vld [vmem:[%s248 + $0x88] sm:$0xf]
      %v308 = vld [vmem:[%s248 + $0x8c] sm:$0xf]
      %v309 = vld [vmem:[%s248 + $0x90] sm:$0xf]
      %v310 = vld [vmem:[%s248 + $0x94] sm:$0xf]
      %v311 = vld [vmem:[%s248 + $0x98] sm:$0xf]
      %v312 = vld [vmem:[%s248 + $0x9c] sm:$0xf]
      %v313 = vld [vmem:[%s248 + $0xa0] sm:$0xf]
      %v314 = vld [vmem:[%s248 + $0xa4] sm:$0xf]
      %v315 = vld [vmem:[%s248 + $0xa8] sm:$0xf]
      %v316 = vld [vmem:[%s248 + $0xac] sm:$0xf]
      %v317 = vld [vmem:[%s248 + $0xb0] sm:$0xf]
      %v318 = vld [vmem:[%s248 + $0xb4] sm:$0xf]
      %v319 = vld [vmem:[%s248 + $0xb8] sm:$0xf]
      %v320 = vld [vmem:[%s248 + $0xbc] sm:$0xf]
      %v321 = vld [vmem:[%s248 + $0xc0] sm:$0xf]
      %v322 = vld [vmem:[%s248 + $0xc4] sm:$0xf]
      %v323 = vld [vmem:[%s248 + $0xc8] sm:$0xf]
      %v324 = vld [vmem:[%s248 + $0xcc] sm:$0xf]
      %v325 = vld [vmem:[%s248 + $0xd0] sm:$0xf]
      %v326 = vld [vmem:[%s248 + $0xd4] sm:$0xf]
      %v327 = vld [vmem:[%s248 + $0xd8] sm:$0xf]
      %v328 = vld [vmem:[%s248 + $0xdc] sm:$0xf]
      %v329 = vld [vmem:[%s248 + $0xe0] sm:$0xf]
      %v330 = vld [vmem:[%s248 + $0xe4] sm:$0xf]
      %v331 = vld [vmem:[%s248 + $0xe8] sm:$0xf]
      %v332 = vld [vmem:[%s248 + $0xec] sm:$0xf]
      %v333 = vld [vmem:[%s248 + $0xf0] sm:$0xf]
      %v334 = vld [vmem:[%s248 + $0xf4] sm:$0xf]
      %v335 = vld [vmem:[%s248 + $0xf8] sm:$0xf]
      %v336 = vld [vmem:[%s248 + $0xfc] sm:$0xf]
      %v339 = vunpack.c.l.b16 %v271
      %v340 = vunpack.c.h.b16 %v271
      %v341 = vunpack.c.l.b16 %v272
      %v342 = vunpack.c.h.b16 %v272
      %v343 = vpack.c.b16 %v339, %v339
      %v344 = vpack.c.b16 %v340, %v340
      %v345 = vpack.c.b16 %v341, %v341
      %v346 = vpack.c.b16 %v342, %v342
      %v415 = vunpack.c.l.b16 %v273
      %v416 = vunpack.c.l.b16 %v274
      %v417 = vunpack.c.l.b16 %v275
      %v418 = vunpack.c.l.b16 %v276
      %v419 = vunpack.c.l.b16 %v277
      %v420 = vunpack.c.l.b16 %v278
      %v421 = vunpack.c.l.b16 %v279
      %v422 = vunpack.c.l.b16 %v280
      %v423 = vunpack.c.l.b16 %v281
      %v424 = vunpack.c.l.b16 %v282
      %v425 = vunpack.c.l.b16 %v283
      %v426 = vunpack.c.l.b16 %v284
      %v427 = vunpack.c.l.b16 %v285
      %v428 = vunpack.c.l.b16 %v286
      %v429 = vunpack.c.l.b16 %v287
      %v430 = vunpack.c.l.b16 %v288
      %v431 = vunpack.c.l.b16 %v289
      %v432 = vunpack.c.l.b16 %v290
      %v433 = vunpack.c.l.b16 %v291
      %v434 = vunpack.c.l.b16 %v292
      %v435 = vunpack.c.l.b16 %v293
      %v436 = vunpack.c.l.b16 %v294
      %v437 = vunpack.c.l.b16 %v295
      %v438 = vunpack.c.l.b16 %v296
      %v439 = vunpack.c.l.b16 %v297
      %v440 = vunpack.c.l.b16 %v298
      %v441 = vunpack.c.l.b16 %v299
      %v442 = vunpack.c.l.b16 %v300
      %v443 = vunpack.c.l.b16 %v301
      %v444 = vunpack.c.l.b16 %v302
      %v445 = vunpack.c.l.b16 %v303
      %v446 = vunpack.c.l.b16 %v304
      %v447 = vunpack.c.l.b16 %v305
      %v448 = vunpack.c.l.b16 %v306
      %v449 = vunpack.c.l.b16 %v307
      %v450 = vunpack.c.l.b16 %v308
      %v451 = vunpack.c.l.b16 %v309
      %v452 = vunpack.c.l.b16 %v310
      %v453 = vunpack.c.l.b16 %v311
      %v454 = vunpack.c.l.b16 %v312
      %v455 = vunpack.c.l.b16 %v313
      %v456 = vunpack.c.l.b16 %v314
      %v457 = vunpack.c.l.b16 %v315
      %v458 = vunpack.c.l.b16 %v316
      %v459 = vunpack.c.l.b16 %v317
      %v460 = vunpack.c.l.b16 %v318
      %v461 = vunpack.c.l.b16 %v319
      %v462 = vunpack.c.l.b16 %v320
      %v463 = vunpack.c.l.b16 %v321
      %v464 = vunpack.c.l.b16 %v322
      %v465 = vunpack.c.l.b16 %v323
      %v466 = vunpack.c.l.b16 %v324
      %v467 = vunpack.c.l.b16 %v325
      %v468 = vunpack.c.l.b16 %v326
      %v469 = vunpack.c.l.b16 %v327
      %v470 = vunpack.c.l.b16 %v328
      %v471 = vunpack.c.l.b16 %v329
      %v472 = vunpack.c.l.b16 %v330
      %v473 = vunpack.c.l.b16 %v331
      %v474 = vunpack.c.l.b16 %v332
      %v475 = vunpack.c.l.b16 %v333
      %v476 = vunpack.c.l.b16 %v334
      %v477 = vunpack.c.l.b16 %v335
      %v478 = vunpack.c.l.b16 %v336
      %v479 = vpack.c.b16 %v416, %v415
      %v480 = vpack.c.b16 %v418, %v417
      %v481 = vpack.c.b16 %v420, %v419
      %v482 = vpack.c.b16 %v422, %v421
      %v483 = vpack.c.b16 %v424, %v423
      %v484 = vpack.c.b16 %v426, %v425
      %v485 = vpack.c.b16 %v428, %v427
      %v486 = vpack.c.b16 %v430, %v429
      %v487 = vpack.c.b16 %v432, %v431
      %v488 = vpack.c.b16 %v434, %v433
      %v489 = vpack.c.b16 %v436, %v435
      %v490 = vpack.c.b16 %v438, %v437
      %v491 = vpack.c.b16 %v440, %v439
      %v492 = vpack.c.b16 %v442, %v441
      %v493 = vpack.c.b16 %v444, %v443
      %v494 = vpack.c.b16 %v446, %v445
      %v495 = vpack.c.b16 %v448, %v447
      %v496 = vpack.c.b16 %v450, %v449
      %v497 = vpack.c.b16 %v452, %v451
      %v498 = vpack.c.b16 %v454, %v453
      %v499 = vpack.c.b16 %v456, %v455
      %v500 = vpack.c.b16 %v458, %v457
      %v501 = vpack.c.b16 %v460, %v459
      %v502 = vpack.c.b16 %v462, %v461
      %v503 = vpack.c.b16 %v464, %v463
      %v504 = vpack.c.b16 %v466, %v465
      %v505 = vpack.c.b16 %v468, %v467
      %v506 = vpack.c.b16 %v470, %v469
      %v507 = vpack.c.b16 %v472, %v471
      %v508 = vpack.c.b16 %v474, %v473
      %v509 = vpack.c.b16 %v476, %v475
      %v510 = vpack.c.b16 %v478, %v477
      %543 = vmatprep.subr.bf16.mxu0 0
      %544 = vmatpush1.bf16.msra.mxu0 %v486
      %545 = vmatprep.subr.bf16.mxu0 0
      %546 = vmatpush1.bf16.msra.mxu0 %v485
      %547 = vmatprep.subr.bf16.mxu0 0
      %548 = vmatpush1.bf16.msra.mxu0 %v484
      %549 = vmatprep.subr.bf16.mxu0 0
      %550 = vmatpush1.bf16.msra.mxu0 %v483
      %551 = vmatprep.subr.bf16.mxu0 0
      %552 = vmatpush1.bf16.msra.mxu0 %v482
      %553 = vmatprep.subr.bf16.mxu0 0
      %554 = vmatpush1.bf16.msra.mxu0 %v481
      %555 = vmatprep.subr.bf16.mxu0 0
      %556 = vmatpush1.bf16.msra.mxu0 %v480
      %557 = vmatprep.subr.bf16.mxu0 0
      %558 = vmatpush1.bf16.msra.mxu0 %v479
      %559 = vmatprep.subr.bf16.mxu0 0
      %560 = vmatpush2.bf16.msra.mxu0 %v494
      %561 = vmatprep.subr.bf16.mxu0 0
      %562 = vmatpush2.bf16.msra.mxu0 %v493
      %563 = vmatprep.subr.bf16.mxu0 0
      %564 = vmatpush2.bf16.msra.mxu0 %v492
      %565 = vmatprep.subr.bf16.mxu0 0
      %566 = vmatpush2.bf16.msra.mxu0 %v491
      %567 = vmatprep.subr.bf16.mxu0 0
      %568 = vmatpush2.bf16.msra.mxu0 %v490
      %569 = vmatprep.subr.bf16.mxu0 0
      %570 = vmatpush2.bf16.msra.mxu0 %v489
      %571 = vmatprep.subr.bf16.mxu0 0
      %572 = vmatpush2.bf16.msra.mxu0 %v488
      %573 = vmatprep.subr.bf16.mxu0 0
      %574 = vmatpush2.bf16.msra.mxu0 %v487
      %575 = vmatprep.mubr.bf16.mxu0 %v344
      %576 = vmatmul.mubr.bf16.gmra.mxu0 %v343
      %v577 = vpop.f32.mrf.mxu0
      %v578 = vadd.f32 0.0, %v577
      %v579 = vpop.f32.mrf.mxu0
      %v580 = vpop.f32.mrf.mxu0
      %v581 = vpop.f32.mrf.mxu0
      %582 = vdwg.mxu0
      %583 = vmatprep.subr.bf16.mxu0 0
      %584 = vmatpush1.bf16.msra.mxu0 %v502
      %585 = vmatprep.subr.bf16.mxu0 0
      %586 = vmatpush1.bf16.msra.mxu0 %v501
      %587 = vmatprep.subr.bf16.mxu0 0
      %588 = vmatpush1.bf16.msra.mxu0 %v500
      %589 = vmatprep.subr.bf16.mxu0 0
      %590 = vmatpush1.bf16.msra.mxu0 %v499
      %591 = vmatprep.subr.bf16.mxu0 0
      %592 = vmatpush1.bf16.msra.mxu0 %v498
      %593 = vmatprep.subr.bf16.mxu0 0
      %594 = vmatpush1.bf16.msra.mxu0 %v497
      %595 = vmatprep.subr.bf16.mxu0 0
      %596 = vmatpush1.bf16.msra.mxu0 %v496
      %597 = vmatprep.subr.bf16.mxu0 0
      %598 = vmatpush1.bf16.msra.mxu0 %v495
      %599 = vmatprep.subr.bf16.mxu0 0
      %600 = vmatpush2.bf16.msra.mxu0 %v510
      %601 = vmatprep.subr.bf16.mxu0 0
      %602 = vmatpush2.bf16.msra.mxu0 %v509
      %603 = vmatprep.subr.bf16.mxu0 0
      %604 = vmatpush2.bf16.msra.mxu0 %v508
      %605 = vmatprep.subr.bf16.mxu0 0
      %606 = vmatpush2.bf16.msra.mxu0 %v507
      %607 = vmatprep.subr.bf16.mxu0 0
      %608 = vmatpush2.bf16.msra.mxu0 %v506
      %609 = vmatprep.subr.bf16.mxu0 0
      %610 = vmatpush2.bf16.msra.mxu0 %v505
      %611 = vmatprep.subr.bf16.mxu0 0
      %612 = vmatpush2.bf16.msra.mxu0 %v504
      %613 = vmatprep.subr.bf16.mxu0 0
      %614 = vmatpush2.bf16.msra.mxu0 %v503
      %615 = vmatprep.mubr.bf16.mxu0 %v346
      %616 = vmatmul.mubr.bf16.gmra.mxu0 %v345
      %v617 = vpop.f32.mrf.mxu0
      %v618 = vadd.f32 %v578, %v617
      %v619 = vpop.f32.mrf.mxu0
      %v620 = vpop.f32.mrf.mxu0
      %v621 = vpop.f32.mrf.mxu0
      %622 = vdwg.mxu0
      %v623 = vadd.f32 %v270, %v618
      %624 = vst [vmem:[#allocation2] sm:$0xff] %v623
      %p625 = scmp.eq.s32.totalorder %s22, 3
      // Predicated region
      $region33: #{discriminator_forward.8} parent=27 // pred_check
        %p626 = pneg %p625
      $region34: #{discriminator_forward.8} parent=27 // pred_check_branch
        %628 = sbr.rel (%p626) target = $region36
      $region35: #{discriminator_forward.8} parent=27 // pred_region
        %v629 = vld [vmem:[#allocation2] sm:$0xff]
        %v630 = vpack.c.bf16 %v629, %v629
        %631 = vst [vmem:[%s256] sm:$0xf] %v630
        %v632 = vrot.slane %v629, 4
        %v633 = vadd.f32 %v629, %v632
        %v634 = vrot.slane %v633, 2
        %v635 = vadd.f32 %v633, %v634
        %v636 = vrot.slane %v635, 1
        %v637 = vadd.f32 %v635, %v636
        %v638 = vmul.f32 %v629, %v629
        %v639 = vrot.slane %v638, 4
        %v640 = vadd.f32 %v638, %v639
        %v641 = vrot.slane %v640, 2
        %v642 = vadd.f32 %v640, %v641
        %v643 = vrot.slane %v642, 1
        %v644 = vadd.f32 %v642, %v643
        %v645 = vlaneseq
        %v646 = vshrl.u32 %v645, 7
        %vm647 = vcmp.eq.s32.totalorder %v646, 0
        %vm648 = vcmp.eq.s32.totalorder %v646, 1
        %v649 = vsel %vm648, %v644, 0.0
        %v650 = vsel %vm647, %v637, %v649
        %651 = vst [vmem:[%s263] sm:$0xff] %v650
      $region36: #{discriminator_forward.8} parent=27 // pred_fallthru
        _
      %p652 = scmp.lt.s32.totalorder %s20, 0
      %s653 = scalar_select %p652, %s20, 0
      %p654 = scmp.lt.s32.totalorder %s21, 0
      %s655 = scalar_select %p654, %s21, 0
      %s656 = sadd.s32 %s655, %s653
      %s657 = smul.addr %s656, 4
      %s658 = scalar_lea.vmem %s2, %s657
      %p659 = scmp.lt.s32.totalorder %s20, 0
      %s660 = scalar_select %p659, %s20, 0
      %p661 = scmp.lt.s32.totalorder %s21, 0
      %s662 = scalar_select %p661, %s21, 0
      %s663 = sadd.s32 %s662, %s660
      %s664 = smul.addr %s663, 8
      %s665 = scalar_lea.vmem %s3, %s664
      // Predicated region
      $region37: #{discriminator_forward.8} parent=27 // pred_check
        %p666 = pneg %p110
      $region38: #{discriminator_forward.8} parent=27 // pred_check_branch
        %668 = sbr.rel (%p666) target = $region40
      $region39: #{discriminator_forward.8} parent=27 // pred_region
        _
      $region40: #{discriminator_forward.8} parent=27 // pred_fallthru
        _
      // Predicated region
      $region41: #{discriminator_forward.8} parent=27 // pred_check
        %p669 = pneg %p138
      $region42: #{discriminator_forward.8} parent=27 // pred_check_branch
        %671 = sbr.rel (%p669) target = $region44
      $region43: #{discriminator_forward.8} parent=27 // pred_region
        _
      $region44: #{discriminator_forward.8} parent=27 // pred_fallthru
        _
      // Predicated region
      $region45: #{discriminator_forward.8} parent=27 // pred_check
        %p672 = pneg %p110
      $region46: #{discriminator_forward.8} parent=27 // pred_check_branch
        %674 = sbr.rel (%p672) target = $region48
      $region47: #{discriminator_forward.8} parent=27 // pred_region
        %p675 = scmp.lt.s32.totalorder %s20, 0
        %s676 = scalar_select %p675, %s20, 0
        %p677 = scmp.lt.s32.totalorder %s21, 0
        %s678 = scalar_select %p677, %s21, 0
        %s679 = sadd.s32 %s678, %s676
        %s680 = smul.addr %s679, 4
        %s681 = scalar_lea.vmem %s2, %s680
      $region48: #{discriminator_forward.8} parent=27 // pred_fallthru
        _
      // Predicated region
      $region49: #{discriminator_forward.8} parent=27 // pred_check
        %p682 = pneg %p138
      $region50: #{discriminator_forward.8} parent=27 // pred_check_branch
        %684 = sbr.rel (%p682) target = $region52
      $region51: #{discriminator_forward.8} parent=27 // pred_region
        %p685 = scmp.lt.s32.totalorder %s20, 0
        %s686 = scalar_select %p685, %s20, 0
        %p687 = scmp.lt.s32.totalorder %s21, 0
        %s688 = scalar_select %p687, %s21, 0
        %s689 = sadd.s32 %s688, %s686
        %s690 = smul.addr %s689, 8
        %s691 = scalar_lea.vmem %s3, %s690
      $region52: #{discriminator_forward.8} parent=27 // pred_fallthru
        _
    $region28: #{discriminator_forward.8} parent=5 // pred_fallthru
      _
    %p692 = scmp.le.s32.totalorder 2, %s10
    // Predicated region
    $region53: #{discriminator_forward.8} parent=5 // pred_check
      %p693 = pneg %p692
    $region54: #{discriminator_forward.8} parent=5 // pred_check_branch
      %695 = sbr.rel (%p693) target = $region56
    $region55: #{discriminator_forward.8} parent=5 // pred_region
      %s696 = ssub.s32 %s10, 2
    $region56: #{discriminator_forward.8} parent=5 // pred_fallthru
      _
  $region6: #{discriminator_forward.8} parent=0 // loop_footer
    %s14 = sadd.s32 1, %s10
  $region7: #{discriminator_forward.8} parent=0 // loop_footer_branch
    %9 = sbr.rel target = $region3
  $region8: #{discriminator_forward.8} parent=0 // loop_exit
    _

</llo_original>
